<compile_context>
chip_gen: v5e
topology: v5e:2x2
jax: 0.10.0
libtpu: 0.0.40
codegen_flags: <defaults>
</compile_context>

<pallas_src>
import functools

import jax
import jax.numpy as jnp
from jax import lax
from jax.experimental import pallas as pl
from jax.experimental.pallas import tpu as pltpu

_VMEM_LIMIT = 48 * 1024 * 1024   # below v7x 64 MiB physical, above default scoped limits


def _gconv_kernel(x_ref, w_ref, y_ref, sum_ref, ssq_ref, *, K, stride,
                  H_out, W_out):
    """Grouped/standard conv for one (group, image): im2col + one MXU GEMM.

    Also accumulates per-channel sum / sum-of-squares (BN batch stats) across
    the batch grid axis (axis 1, 'arbitrary').
    """
    Hp, Wp, Cin_g = x_ref.shape[-3:]
    x = x_ref[...].reshape(Hp, Wp, Cin_g)                  # drop unit dims (free)
    w = w_ref[...].reshape(w_ref.shape[-2], w_ref.shape[-1])  # (K*K*Cin_g, Cout_g)

    # im2col: (H_out*W_out, K*K*Cin_g) slab in VMEM, single GEMM with a
    # contraction depth of K*K*Cin_g (vs Cin_g for per-tap matmuls).
    cols = []
    for kh in range(K):
        for kw in range(K):
            patch = lax.slice(
                x, (kh, kw, 0),
                (kh + (H_out - 1) * stride + 1,
                 kw + (W_out - 1) * stride + 1,
                 Cin_g),
                (stride, stride, 1))                       # (H_out, W_out, Cin_g)
            cols.append(patch.reshape(H_out * W_out, Cin_g))
    slab = cols[0] if len(cols) == 1 else jnp.concatenate(cols, axis=-1)
    acc = jnp.dot(slab, w, preferred_element_type=jnp.float32)   # (M, Cout_g)
    y_ref[...] = acc.reshape(y_ref.shape)

    # fused BN batch statistics (f32 accumulators, resident across batch axis)
    @pl.when(pl.program_id(1) == 0)
    def _():
        sum_ref[...] = jnp.zeros_like(sum_ref)
        ssq_ref[...] = jnp.zeros_like(ssq_ref)
    sum_ref[...] += jnp.sum(acc, axis=0, keepdims=True).reshape(sum_ref.shape)
    ssq_ref[...] += jnp.sum(acc * acc, axis=0, keepdims=True).reshape(ssq_ref.shape)


def _dwconv_kernel(x_ref, w_ref, y_ref, sum_ref, ssq_ref, *, K, stride,
                   H_out, W_out):
    """Depthwise conv for one image with the full channel dim on the lane axis."""
    Hp, Wp, C = x_ref.shape[-3:]
    x = x_ref[...].reshape(Hp, Wp, C)
    w = w_ref[...]                                         # (K*K, C)

    acc = jnp.zeros((H_out, W_out, C), jnp.float32)
    for kh in range(K):
        for kw in range(K):
            patch = lax.slice(
                x, (kh, kw, 0),
                (kh + (H_out - 1) * stride + 1,
                 kw + (W_out - 1) * stride + 1,
                 C),
                (stride, stride, 1))                       # (H_out, W_out, C)
            t = kh * K + kw
            acc = acc + patch * w[t:t + 1, :].reshape(1, 1, C)
    y2 = acc.reshape(H_out * W_out, C)
    y_ref[...] = y2.reshape(y_ref.shape)

    @pl.when(pl.program_id(0) == 0)
    def _():
        sum_ref[...] = jnp.zeros_like(sum_ref)
        ssq_ref[...] = jnp.zeros_like(ssq_ref)
    sum_ref[...] += jnp.sum(y2, axis=0, keepdims=True).reshape(sum_ref.shape)
    ssq_ref[...] += jnp.sum(y2 * y2, axis=0, keepdims=True).reshape(ssq_ref.shape)


def _bn_hswish_nchw_kernel(y_ref, s_ref, b_ref, o_ref):
    """Fused BN affine + Hardswish + in-VMEM (M, C) -> (C, M) transpose (NCHW out)."""
    M, C = y_ref.shape[-2:]
    y = y_ref[...].reshape(M, C)
    s = s_ref[...].reshape(1, C)
    b = b_ref[...].reshape(1, C)
    z = y * s + b
    z = z * jnp.clip(z + 3.0, 0.0, 6.0) * (1.0 / 6.0)      # hardswish
    o_ref[...] = z.T.reshape(o_ref.shape)                  # channels-major (NCHW)


def conv_bn_hardswish(x_nchw, weight, gamma, beta, *, stride, groups, eps=1e-5):
    """Conv2d(no bias) -> BatchNorm2d(train-mode batch stats) -> Hardswish.

    x_nchw: (N, Cin, H, W) f32, weight: (Cout, Cin//groups, K, K) f32.
    Returns (N, Cout, Hout, Wout) f32 (NCHW, matching the PyTorch module).
    """
    N, Cin, H, W = x_nchw.shape
    Cout, Cin_g, K, _ = weight.shape
    assert Cin == Cin_g * groups and Cout % groups == 0
    Cout_g = Cout // groups
    pad = (K - 1) // 2
    H_out = (H + 2 * pad - K) // stride + 1
    W_out = (W + 2 * pad - K) // stride + 1
    Hp, Wp = H + 2 * pad, W + 2 * pad
    M = H_out * W_out
    count = jnp.float32(N * M)

    # NCHW -> padded NHWC (channels on the 128-lane dim).
    x = jnp.transpose(x_nchw, (0, 2, 3, 1)).astype(jnp.float32)
    x = jnp.pad(x, ((0, 0), (pad, pad), (pad, pad), (0, 0)))

    depthwise = (groups == Cin) and Cin_g == 1 and Cout_g == 1

    if depthwise:
        C = Cin
        # (C, 1, K, K) -> (K*K, C), tap-major rows.
        w_dw = jnp.transpose(weight.reshape(C, K, K), (1, 2, 0)).reshape(K * K, C)

        y, ch_sum, ch_ssq = pl.pallas_call(
            functools.partial(_dwconv_kernel, K=K, stride=stride,
                              H_out=H_out, W_out=W_out),
            out_shape=(
                jax.ShapeDtypeStruct((N, M, C), jnp.float32),
                jax.ShapeDtypeStruct((1, 1, C), jnp.float32),
                jax.ShapeDtypeStruct((1, 1, C), jnp.float32),
            ),
            grid=(N,),
            in_specs=[
                pl.BlockSpec((1, Hp, Wp, C), lambda n: (n, 0, 0, 0)),
                pl.BlockSpec((K * K, C), lambda n: (0, 0)),
            ],
            out_specs=(
                pl.BlockSpec((1, M, C), lambda n: (n, 0, 0)),
                pl.BlockSpec((1, 1, C), lambda n: (0, 0, 0)),
                pl.BlockSpec((1, 1, C), lambda n: (0, 0, 0)),
            ),
            compiler_params=pltpu.CompilerParams(
                dimension_semantics=("arbitrary",),   # batch-stat accumulator axis
                vmem_limit_bytes=_VMEM_LIMIT),
        )(x, w_dw)

        mean = ch_sum.reshape(C) / count
        var = jnp.maximum(ch_ssq.reshape(C) / count - mean * mean, 0.0)
        scale = gamma / jnp.sqrt(var + eps)
        bias = beta - mean * scale

        out = pl.pallas_call(
            _bn_hswish_nchw_kernel,
            out_shape=jax.ShapeDtypeStruct((N, C, M), jnp.float32),
            grid=(N,),
            in_specs=[
                pl.BlockSpec((1, M, C), lambda n: (n, 0, 0)),
                pl.BlockSpec((1, C), lambda n: (0, 0)),
                pl.BlockSpec((1, C), lambda n: (0, 0)),
            ],
            out_specs=pl.BlockSpec((1, C, M), lambda n: (n, 0, 0)),
            compiler_params=pltpu.CompilerParams(
                dimension_semantics=("parallel",),
                vmem_limit_bytes=_VMEM_LIMIT),
        )(y, scale.reshape(1, C), bias.reshape(1, C))
        return out.reshape(N, Cout, H_out, W_out)

    # ---- grouped / standard conv path (PP-LCNet non-depthwise: groups == 1) ----
    # (N,Hp,Wp,Cin) -> (groups,N,Hp,Wp,Cin_g); a free reshape when groups == 1.
    x_g = x.reshape(N, Hp, Wp, groups, Cin_g)
    x_g = jnp.transpose(x_g, (3, 0, 1, 2, 4))
    # (Cout,Cin_g,K,K) -> (groups, K*K*Cin_g, Cout_g), rows ordered (kh, kw, cin).
    w_g = weight.reshape(groups, Cout_g, Cin_g, K, K)
    w_g = jnp.transpose(w_g, (0, 3, 4, 2, 1)).reshape(groups, K * K * Cin_g, Cout_g)

    y, ch_sum, ch_ssq = pl.pallas_call(
        functools.partial(_gconv_kernel, K=K, stride=stride,
                          H_out=H_out, W_out=W_out),
        out_shape=(
            jax.ShapeDtypeStruct((groups, N, M, Cout_g), jnp.float32),
            jax.ShapeDtypeStruct((groups, 1, Cout_g), jnp.float32),
            jax.ShapeDtypeStruct((groups, 1, Cout_g), jnp.float32),
        ),
        grid=(groups, N),
        in_specs=[
            pl.BlockSpec((1, 1, Hp, Wp, Cin_g), lambda g, n: (g, n, 0, 0, 0)),
            pl.BlockSpec((1, K * K * Cin_g, Cout_g), lambda g, n: (g, 0, 0)),
        ],
        out_specs=(
            pl.BlockSpec((1, 1, M, Cout_g), lambda g, n: (g, n, 0, 0)),
            pl.BlockSpec((1, 1, Cout_g), lambda g, n: (g, 0, 0)),   # resident acc
            pl.BlockSpec((1, 1, Cout_g), lambda g, n: (g, 0, 0)),
        ),
        compiler_params=pltpu.CompilerParams(
            dimension_semantics=("parallel", "arbitrary"),
            vmem_limit_bytes=_VMEM_LIMIT),
    )(x_g, w_g)

    mean = ch_sum.reshape(Cout) / count       # (g, c_g) order == original channels
    var = jnp.maximum(ch_ssq.reshape(Cout) / count - mean * mean, 0.0)
    scale = gamma / jnp.sqrt(var + eps)
    bias = beta - mean * scale

    out = pl.pallas_call(
        _bn_hswish_nchw_kernel,
        out_shape=jax.ShapeDtypeStruct((N, groups, Cout_g, M), jnp.float32),
        grid=(groups, N),
        in_specs=[
            pl.BlockSpec((1, 1, M, Cout_g), lambda g, n: (g, n, 0, 0)),
            pl.BlockSpec((1, 1, Cout_g), lambda g, n: (g, 0, 0)),
            pl.BlockSpec((1, 1, Cout_g), lambda g, n: (g, 0, 0)),
        ],
        out_specs=pl.BlockSpec((1, 1, Cout_g, M), lambda g, n: (n, g, 0, 0)),
        compiler_params=pltpu.CompilerParams(
            dimension_semantics=("parallel", "parallel"),
            vmem_limit_bytes=_VMEM_LIMIT),
    )(y, scale.reshape(groups, 1, Cout_g), bias.reshape(groups, 1, Cout_g))
    return out.reshape(N, Cout, H_out, W_out)


def _reference(x_nchw, weight, gamma, beta, *, stride, groups, eps=1e-5):
    """Pure-JAX reference (same semantics as the PyTorch module in train mode)."""
    K = weight.shape[-1]
    pad = (K - 1) // 2
    y = lax.conv_general_dilated(
        x_nchw, weight, window_strides=(stride, stride),
        padding=((pad, pad), (pad, pad)),
        dimension_numbers=("NCHW", "OIHW", "NCHW"),
        feature_group_count=groups,
        precision=lax.Precision.HIGHEST)
    mean = jnp.mean(y, axis=(0, 2, 3), keepdims=True)
    var = jnp.mean((y - mean) ** 2, axis=(0, 2, 3), keepdims=True)
    yhat = (y - mean) / jnp.sqrt(var + eps)
    yhat = yhat * gamma.reshape(1, -1, 1, 1) + beta.reshape(1, -1, 1, 1)
    return yhat * jnp.clip(yhat + 3.0, 0.0, 6.0) / 6.0


if __name__ == "__main__":
    key = jax.random.PRNGKey(0)
    k1, k2, k3, k4, k5 = jax.random.split(key, 5)

    # Case 1: ConvBNLayer(num_channels=4, filter_size=3, num_filters=8, stride=1)
    N, Cin, H, W = 2, 4, 16, 16
    Cout, K, stride, groups = 8, 3, 1, 1
    x = jax.random.normal(k1, (N, Cin, H, W), jnp.float32)
    w = 0.1 * jax.random.normal(k2, (Cout, Cin // groups, K, K), jnp.float32)
    gamma = 1.0 + 0.1 * jax.random.normal(k3, (Cout,), jnp.float32)  # BN weight
    beta = 0.1 * jax.random.normal(k4, (Cout,), jnp.float32)         # BN bias

    out = jax.block_until_ready(
        conv_bn_hardswish(x, w, gamma, beta, stride=stride, groups=groups))
    ref = _reference(x, w, gamma, beta, stride=stride, groups=groups)
    assert out.shape == ref.shape == (N, Cout, H, W)
    assert jnp.allclose(out, ref, atol=1e-3, rtol=1e-3), \
        float(jnp.max(jnp.abs(out - ref)))

    # Case 2: grouped conv path, stride=2, num_groups=2.
    stride2, groups2 = 2, 2
    w2 = 0.1 * jax.random.normal(k2, (Cout, Cin // groups2, K, K), jnp.float32)
    out2 = jax.block_until_ready(
        conv_bn_hardswish(x, w2, gamma, beta, stride=stride2, groups=groups2))
    ref2 = _reference(x, w2, gamma, beta, stride=stride2, groups=groups2)
    assert out2.shape == ref2.shape
    assert jnp.allclose(out2, ref2, atol=1e-3, rtol=1e-3), \
        float(jnp.max(jnp.abs(out2 - ref2)))

    # Case 3: depthwise conv (num_groups == num_channels == num_filters), as in PP-LCNet.
    Cd = 8
    xd = jax.random.normal(k5, (N, Cd, H, W), jnp.float32)
    wd = 0.1 * jax.random.normal(k2, (Cd, 1, K, K), jnp.float32)
    out3 = jax.block_until_ready(
        conv_bn_hardswish(xd, wd, gamma, beta, stride=2, groups=Cd))
    ref3 = _reference(xd, wd, gamma, beta, stride=2, groups=Cd)
    assert out3.shape == ref3.shape
    assert jnp.allclose(out3, ref3, atol=1e-3, rtol=1e-3), \
        float(jnp.max(jnp.abs(out3 - ref3)))

    print("KERNEL_OK")
</pallas_src>

<mosaic_0001>
module attributes {stable_mosaic.version = 11 : i64} {
  func.func @_gconv_kernel(%arg0: i32, %arg1: i32, %arg2: memref<1x1x18x18x4xf32, #tpu.memory_space<vmem>>, %arg3: memref<1x36x8xf32, #tpu.memory_space<vmem>>, %arg4: memref<1x1x256x8xf32, #tpu.memory_space<vmem>>, %arg5: memref<1x1x8xf32, #tpu.memory_space<vmem>>, %arg6: memref<1x1x8xf32, #tpu.memory_space<vmem>>) attributes {dimension_semantics = [#tpu.dimension_semantics<parallel>, #tpu.dimension_semantics<arbitrary>], iteration_bounds = array<i64: 1, 2>, scalar_prefetch = 0 : i64, scratch_operands = 0 : i64, tpu.core_type = #tpu.core_type<tc>, window_params = [{transform_indices = @transform_0, window_bounds = array<i64: 1, 1, 18, 18, 4>}, {transform_indices = @transform_1, window_bounds = array<i64: 1, 36, 8>}, {transform_indices = @transform_2, window_bounds = array<i64: 1, 1, 256, 8>}, {transform_indices = @transform_3, window_bounds = array<i64: 1, 1, 8>}, {transform_indices = @transform_4, window_bounds = array<i64: 1, 1, 8>}]} {
    %c0 = arith.constant 0 : index
    %c0_0 = arith.constant 0 : index
    %c0_1 = arith.constant 0 : index
    %c0_2 = arith.constant 0 : index
    %c0_3 = arith.constant 0 : index
    %0 = vector.load %arg2[%c0, %c0_0, %c0_1, %c0_2, %c0_3] : memref<1x1x18x18x4xf32, #tpu.memory_space<vmem>>, vector<1x1x18x18x4xf32>
    %1 = vector.shape_cast %0 : vector<1x1x18x18x4xf32> to vector<18x18x4xf32>
    %c0_4 = arith.constant 0 : index
    %c0_5 = arith.constant 0 : index
    %c0_6 = arith.constant 0 : index
    %2 = vector.load %arg3[%c0_4, %c0_5, %c0_6] : memref<1x36x8xf32, #tpu.memory_space<vmem>>, vector<1x36x8xf32>
    %3 = vector.shape_cast %2 : vector<1x36x8xf32> to vector<36x8xf32>
    %4 = vector.extract_strided_slice %1 {offsets = [0, 0, 0], sizes = [16, 16, 4], strides = [1, 1, 1]} : vector<18x18x4xf32> to vector<16x16x4xf32>
    %5 = vector.shape_cast %4 : vector<16x16x4xf32> to vector<256x4xf32>
    %6 = vector.extract_strided_slice %1 {offsets = [0, 1, 0], sizes = [16, 16, 4], strides = [1, 1, 1]} : vector<18x18x4xf32> to vector<16x16x4xf32>
    %7 = vector.shape_cast %6 : vector<16x16x4xf32> to vector<256x4xf32>
    %8 = vector.extract_strided_slice %1 {offsets = [0, 2, 0], sizes = [16, 16, 4], strides = [1, 1, 1]} : vector<18x18x4xf32> to vector<16x16x4xf32>
    %9 = vector.shape_cast %8 : vector<16x16x4xf32> to vector<256x4xf32>
    %10 = vector.extract_strided_slice %1 {offsets = [1, 0, 0], sizes = [16, 16, 4], strides = [1, 1, 1]} : vector<18x18x4xf32> to vector<16x16x4xf32>
    %11 = vector.shape_cast %10 : vector<16x16x4xf32> to vector<256x4xf32>
    %12 = vector.extract_strided_slice %1 {offsets = [1, 1, 0], sizes = [16, 16, 4], strides = [1, 1, 1]} : vector<18x18x4xf32> to vector<16x16x4xf32>
    %13 = vector.shape_cast %12 : vector<16x16x4xf32> to vector<256x4xf32>
    %14 = vector.extract_strided_slice %1 {offsets = [1, 2, 0], sizes = [16, 16, 4], strides = [1, 1, 1]} : vector<18x18x4xf32> to vector<16x16x4xf32>
    %15 = vector.shape_cast %14 : vector<16x16x4xf32> to vector<256x4xf32>
    %16 = vector.extract_strided_slice %1 {offsets = [2, 0, 0], sizes = [16, 16, 4], strides = [1, 1, 1]} : vector<18x18x4xf32> to vector<16x16x4xf32>
    %17 = vector.shape_cast %16 : vector<16x16x4xf32> to vector<256x4xf32>
    %18 = vector.extract_strided_slice %1 {offsets = [2, 1, 0], sizes = [16, 16, 4], strides = [1, 1, 1]} : vector<18x18x4xf32> to vector<16x16x4xf32>
    %19 = vector.shape_cast %18 : vector<16x16x4xf32> to vector<256x4xf32>
    %20 = vector.extract_strided_slice %1 {offsets = [2, 2, 0], sizes = [16, 16, 4], strides = [1, 1, 1]} : vector<18x18x4xf32> to vector<16x16x4xf32>
    %21 = vector.shape_cast %20 : vector<16x16x4xf32> to vector<256x4xf32>
    %22 = tpu.concatenate %5, %7, %9, %11, %13, %15, %17, %19, %21 in 1 : vector<256x4xf32>, vector<256x4xf32>, vector<256x4xf32>, vector<256x4xf32>, vector<256x4xf32>, vector<256x4xf32>, vector<256x4xf32>, vector<256x4xf32>, vector<256x4xf32> -> vector<256x36xf32>
    %cst = arith.constant dense<0.000000e+00> : vector<256x8xf32>
    %23 = tpu.matmul %22, %3, %cst {dimension_numbers = #tpu.dot_dimension_numbers<[1], [0], [0], [1], [0, 0, 1, 1], [], []>} : vector<256x36xf32>, vector<36x8xf32>, vector<256x8xf32> -> vector<256x8xf32>
    %24 = vector.shape_cast %23 : vector<256x8xf32> to vector<1x1x256x8xf32>
    %c0_7 = arith.constant 0 : index
    %c0_8 = arith.constant 0 : index
    %c0_9 = arith.constant 0 : index
    %c0_10 = arith.constant 0 : index
    %25 = vector.load %arg4[%c0_7, %c0_8, %c0_9, %c0_10] : memref<1x1x256x8xf32, #tpu.memory_space<vmem>>, vector<1x1x256x8xf32>
    tpu.vector_store %arg4[%c0_7, %c0_8, %c0_9, %c0_10], %24 {strides = array<i32>} : memref<1x1x256x8xf32, #tpu.memory_space<vmem>>, vector<1x1x256x8xf32>,
    %c0_i32 = arith.constant 0 : i32
    %26 = arith.cmpi eq, %arg1, %c0_i32 : i32
    %27 = arith.extui %26 : i1 to i32
    %c0_i32_11 = arith.constant 0 : i32
    %28 = arith.cmpi ne, %27, %c0_i32_11 : i32
    scf.if %28 {
      %cst_26 = arith.constant 0.000000e+00 : f32
      %42 = vector.broadcast %cst_26 : f32 to vector<1x1x8xf32>
      %c0_27 = arith.constant 0 : index
      %c0_28 = arith.constant 0 : index
      %c0_29 = arith.constant 0 : index
      %43 = vector.load %arg5[%c0_27, %c0_28, %c0_29] : memref<1x1x8xf32, #tpu.memory_space<vmem>>, vector<1x1x8xf32>
      tpu.vector_store %arg5[%c0_27, %c0_28, %c0_29], %42 {strides = array<i32>} : memref<1x1x8xf32, #tpu.memory_space<vmem>>, vector<1x1x8xf32>,
      %cst_30 = arith.constant 0.000000e+00 : f32
      %44 = vector.broadcast %cst_30 : f32 to vector<1x1x8xf32>
      %c0_31 = arith.constant 0 : index
      %c0_32 = arith.constant 0 : index
      %c0_33 = arith.constant 0 : index
      %45 = vector.load %arg6[%c0_31, %c0_32, %c0_33] : memref<1x1x8xf32, #tpu.memory_space<vmem>>, vector<1x1x8xf32>
      tpu.vector_store %arg6[%c0_31, %c0_32, %c0_33], %44 {strides = array<i32>} : memref<1x1x8xf32, #tpu.memory_space<vmem>>, vector<1x1x8xf32>,
    } else {
    }
    %c0_12 = arith.constant 0 : index
    %c0_13 = arith.constant 0 : index
    %c0_14 = arith.constant 0 : index
    %29 = vector.load %arg5[%c0_12, %c0_13, %c0_14] : memref<1x1x8xf32, #tpu.memory_space<vmem>>, vector<1x1x8xf32>
    %cst_15 = arith.constant dense<0.000000e+00> : vector<8xf32>
    %30 = vector.multi_reduction <add>, %23, %cst_15 [0] : vector<256x8xf32> to vector<8xf32>
    %31 = vector.shape_cast %30 : vector<8xf32> to vector<1x8xf32>
    %32 = vector.shape_cast %31 : vector<1x8xf32> to vector<1x1x8xf32>
    %33 = arith.addf %29, %32 : vector<1x1x8xf32>
    %c0_16 = arith.constant 0 : index
    %c0_17 = arith.constant 0 : index
    %c0_18 = arith.constant 0 : index
    %34 = vector.load %arg5[%c0_16, %c0_17, %c0_18] : memref<1x1x8xf32, #tpu.memory_space<vmem>>, vector<1x1x8xf32>
    tpu.vector_store %arg5[%c0_16, %c0_17, %c0_18], %33 {strides = array<i32>} : memref<1x1x8xf32, #tpu.memory_space<vmem>>, vector<1x1x8xf32>,
    %c0_19 = arith.constant 0 : index
    %c0_20 = arith.constant 0 : index
    %c0_21 = arith.constant 0 : index
    %35 = vector.load %arg6[%c0_19, %c0_20, %c0_21] : memref<1x1x8xf32, #tpu.memory_space<vmem>>, vector<1x1x8xf32>
    %36 = arith.mulf %23, %23 : vector<256x8xf32>
    %cst_22 = arith.constant dense<0.000000e+00> : vector<8xf32>
    %37 = vector.multi_reduction <add>, %36, %cst_22 [0] : vector<256x8xf32> to vector<8xf32>
    %38 = vector.shape_cast %37 : vector<8xf32> to vector<1x8xf32>
    %39 = vector.shape_cast %38 : vector<1x8xf32> to vector<1x1x8xf32>
    %40 = arith.addf %35, %39 : vector<1x1x8xf32>
    %c0_23 = arith.constant 0 : index
    %c0_24 = arith.constant 0 : index
    %c0_25 = arith.constant 0 : index
    %41 = vector.load %arg6[%c0_23, %c0_24, %c0_25] : memref<1x1x8xf32, #tpu.memory_space<vmem>>, vector<1x1x8xf32>
    tpu.vector_store %arg6[%c0_23, %c0_24, %c0_25], %40 {strides = array<i32>} : memref<1x1x8xf32, #tpu.memory_space<vmem>>, vector<1x1x8xf32>,
    return
  }
  func.func @transform_0(%arg0: i32, %arg1: i32) -> (i32, i32, i32, i32, i32) {
    %c0_i32 = arith.constant 0 : i32
    %c0_i32_0 = arith.constant 0 : i32
    %c0_i32_1 = arith.constant 0 : i32
    %c0_i32_2 = arith.constant 0 : i32
    return %arg0, %arg1, %c0_i32, %c0_i32_0, %c0_i32_1 : i32, i32, i32, i32, i32
  }
  func.func @transform_1(%arg0: i32, %arg1: i32) -> (i32, i32, i32) {
    %c0_i32 = arith.constant 0 : i32
    %c0_i32_0 = arith.constant 0 : i32
    %c0_i32_1 = arith.constant 0 : i32
    return %arg0, %c0_i32, %c0_i32_0 : i32, i32, i32
  }
  func.func @transform_2(%arg0: i32, %arg1: i32) -> (i32, i32, i32, i32) {
    %c0_i32 = arith.constant 0 : i32
    %c0_i32_0 = arith.constant 0 : i32
    %c0_i32_1 = arith.constant 0 : i32
    return %arg0, %arg1, %c0_i32, %c0_i32_0 : i32, i32, i32, i32
  }
  func.func @transform_3(%arg0: i32, %arg1: i32) -> (i32, i32, i32) {
    %c0_i32 = arith.constant 0 : i32
    %c0_i32_0 = arith.constant 0 : i32
    %c0_i32_1 = arith.constant 0 : i32
    return %arg0, %c0_i32, %c0_i32_0 : i32, i32, i32
  }
  func.func @transform_4(%arg0: i32, %arg1: i32) -> (i32, i32, i32) {
    %c0_i32 = arith.constant 0 : i32
    %c0_i32_0 = arith.constant 0 : i32
    %c0_i32_1 = arith.constant 0 : i32
    return %arg0, %c0_i32, %c0_i32_0 : i32, i32, i32
  }
}

</mosaic_0001>

<llo_original>
// kernel: tpu_custom_call.1
$region0: #{tpu_custom_call.1}
  #allocation0 [shape = 'u32[]', space=smem, size = 0x4, offset = 0x4, fixed_abs, tag = 'smem constant byte address 0x4 - core index']
  #allocation1 [shape = 'u32[72,128]{1,0:T(1,128)}', space=vmem, size = 0x9000, scoped, tag = 'internal scratch']
  %s0 = inlined_call_operand.vmem [shape: f32[1,2,18,18,4], index: 0, kind: input, shape index: {}]
  %s1 = inlined_call_operand.vmem [shape: f32[1,36,8], index: 1, kind: input, shape index: {}]
  %s2 = inlined_call_operand.vmem [shape: f32[1,2,256,8], index: 2, kind: output, shape index: {0}]
  %s3 = inlined_call_operand.hbm [shape: f32[1,1,8], index: 3, kind: output, shape index: {1}]
  %s4 = inlined_call_operand.hbm [shape: f32[1,1,8], index: 4, kind: output, shape index: {2}]
  %5 = xla_tuple %s2, %s3, %s4
  %s6 = sld [smem:[#allocation0]]
  $region61: #{tpu_custom_call.1} parent=0
    _
  %s8 = ssub.s32 1, %s6
  %s9 = scalar_select 0, %s8, %s6
  $region1: #{tpu_custom_call.1} parent=0
    #allocation2 [shape = 'u8[512]{0}', space=vmem, size = 0x400, scoped, tag = 'output window, operand 1, single buffered']
    #allocation3 [shape = 's32[2]{0}', space=sflag, size = 0x8, scoped, tag = 'scoped memory for tpu_custom_call.1']
    #allocation4 [shape = 'u8[512]{0}', space=vmem, size = 0x400, scoped, tag = 'output window, operand 2, single buffered']
    #allocation5 [shape = 's32[1]{0}', space=sflag, size = 0x4, scoped, tag = 'scoped memory for tpu_custom_call.1']
    %10 = vsyncpa [#allocation3], 0
    %11 = vsyncpa [#allocation5], 0
    loop: start=0, step=1, limit=4
    $region2: #{tpu_custom_call.1} parent=1 // loop_pre_header
      _
    $region3: #{tpu_custom_call.1} parent=1 // loop_header
      %s13 = sphi 0, %s17
      %p14 = scmp.ge.s32.totalorder %s13, 4
      %s20 = sphi 0, %s32
      %s21 = sphi 0, %s28
      %s22 = sphi 0, %s20
      %s23 = sphi 0, %s21
      %s24 = sphi 0, %s22
      %s25 = sphi 0, %s23
      %s37 = sphi 0, %s39
      %s40 = sphi 0, %s37
      %s41 = sphi 0, %s40
      %s57 = sphi 0, %s41
      %s63 = sphi 0, %s65
      %s66 = sphi 0, %s63
      %s67 = sphi 0, %s66
      %s83 = sphi 0, %s67
      %s91 = sphi 0, %s93
      %s94 = sphi 0, %s91
      %s95 = sphi 0, %s94
      %s111 = sphi 0, %s95
      %s117 = sphi 0, %s119
      %s120 = sphi 0, %s117
      %s121 = sphi 0, %s120
      %s137 = sphi 0, %s121
      %s143 = sphi 0, %s145
      %s146 = sphi 0, %s143
      %s147 = sphi 0, %s146
      %s163 = sphi 0, %s147
    $region4: #{tpu_custom_call.1} parent=1 // loop_header_branch
      %16 = sbr.rel (%p14) target = $region8
    $region5: #{tpu_custom_call.1} parent=1 // loop_body
      %s18 = ssub.s32 %s13, 1
      %s19 = ssub.s32 %s13, 2
      %s26 = sadd.s32 1, %s21
      %p27 = scmp.ge.s32.totalorder %s26, 2
      %s28 = scalar_select %p27, 0, %s26
      %s29 = sadd.s32 1, %s20
      %s30 = scalar_select %p27, %s29, %s20
      %p31 = scmp.ge.s32.totalorder %s30, 1
      %s32 = scalar_select %p31, 0, %s30
      %s33 = ssub.s32 %s20, %s32
      %s34 = ssub.s32 %s21, %s28
      %s35 = sor.u32 %s33, %s34
      %p36 = scmp.eq.s32.totalorder %s35, 0
      %s38 = sadd.s32 %s37, 1
      %s39 = scalar_select %p36, %s37, %s38
      %p42 = pneg %p36
      %p43 = scmp.eq.s32.totalorder %s13, 1
      %p44 = por %p42, %p43
      %p45 = scmp.ne.s32.totalorder %s37, %s40
      %p46 = scmp.eq.s32.totalorder %s13, 0
      %p47 = por %p45, %p46
      %p48 = scmp.ne.s32.totalorder %s37, %s40
      %p49 = scmp.eq.s32.totalorder %s18, 1
      %p50 = por %p48, %p49
      %p51 = scmp.ne.s32.totalorder %s40, %s41
      %p52 = scmp.eq.s32.totalorder %s18, 0
      %p53 = por %p51, %p52
      %p54 = scmp.ne.s32.totalorder %s40, %s41
      %p55 = scmp.eq.s32.totalorder %s19, 1
      %p56 = por %p54, %p55
      %p58 = scmp.ne.s32.totalorder %s41, %s57
      %p59 = scmp.eq.s32.totalorder %s19, 0
      %p60 = por %p58, %p59
      %s61 = ssub.s32 %s20, %s32
      %p62 = scmp.eq.s32.totalorder %s61, 0
      %s64 = sadd.s32 %s63, 1
      %s65 = scalar_select %p62, %s63, %s64
      %p68 = pneg %p62
      %p69 = scmp.eq.s32.totalorder %s13, 1
      %p70 = por %p68, %p69
      %p71 = scmp.ne.s32.totalorder %s63, %s66
      %p72 = scmp.eq.s32.totalorder %s13, 0
      %p73 = por %p71, %p72
      %p74 = scmp.ne.s32.totalorder %s63, %s66
      %p75 = scmp.eq.s32.totalorder %s18, 1
      %p76 = por %p74, %p75
      %p77 = scmp.ne.s32.totalorder %s66, %s67
      %p78 = scmp.eq.s32.totalorder %s18, 0
      %p79 = por %p77, %p78
      %p80 = scmp.ne.s32.totalorder %s66, %s67
      %p81 = scmp.eq.s32.totalorder %s19, 1
      %p82 = por %p80, %p81
      %p84 = scmp.ne.s32.totalorder %s67, %s83
      %p85 = scmp.eq.s32.totalorder %s19, 0
      %p86 = por %p84, %p85
      %s87 = ssub.s32 %s20, %s32
      %s88 = ssub.s32 %s21, %s28
      %s89 = sor.u32 %s87, %s88
      %p90 = scmp.eq.s32.totalorder %s89, 0
      %s92 = sadd.s32 %s91, 1
      %s93 = scalar_select %p90, %s91, %s92
      %p96 = pneg %p90
      %p97 = scmp.eq.s32.totalorder %s13, 1
      %p98 = por %p96, %p97
      %p99 = scmp.ne.s32.totalorder %s91, %s94
      %p100 = scmp.eq.s32.totalorder %s13, 0
      %p101 = por %p99, %p100
      %p102 = scmp.ne.s32.totalorder %s91, %s94
      %p103 = scmp.eq.s32.totalorder %s18, 1
      %p104 = por %p102, %p103
      %p105 = scmp.ne.s32.totalorder %s94, %s95
      %p106 = scmp.eq.s32.totalorder %s18, 0
      %p107 = por %p105, %p106
      %p108 = scmp.ne.s32.totalorder %s94, %s95
      %p109 = scmp.eq.s32.totalorder %s19, 1
      %p110 = por %p108, %p109
      %p112 = scmp.ne.s32.totalorder %s95, %s111
      %p113 = scmp.eq.s32.totalorder %s19, 0
      %p114 = por %p112, %p113
      %s115 = ssub.s32 %s20, %s32
      %p116 = scmp.eq.s32.totalorder %s115, 0
      %s118 = sadd.s32 %s117, 1
      %s119 = scalar_select %p116, %s117, %s118
      %p122 = pneg %p116
      %p123 = scmp.eq.s32.totalorder %s13, 1
      %p124 = por %p122, %p123
      %p125 = scmp.ne.s32.totalorder %s117, %s120
      %p126 = scmp.eq.s32.totalorder %s13, 0
      %p127 = por %p125, %p126
      %p128 = scmp.ne.s32.totalorder %s117, %s120
      %p129 = scmp.eq.s32.totalorder %s18, 1
      %p130 = por %p128, %p129
      %p131 = scmp.ne.s32.totalorder %s120, %s121
      %p132 = scmp.eq.s32.totalorder %s18, 0
      %p133 = por %p131, %p132
      %p134 = scmp.ne.s32.totalorder %s120, %s121
      %p135 = scmp.eq.s32.totalorder %s19, 1
      %p136 = por %p134, %p135
      %p138 = scmp.ne.s32.totalorder %s121, %s137
      %p139 = scmp.eq.s32.totalorder %s19, 0
      %p140 = por %p138, %p139
      %s141 = ssub.s32 %s20, %s32
      %p142 = scmp.eq.s32.totalorder %s141, 0
      %s144 = sadd.s32 %s143, 1
      %s145 = scalar_select %p142, %s143, %s144
      %p148 = pneg %p142
      %p149 = scmp.eq.s32.totalorder %s13, 1
      %p150 = por %p148, %p149
      %p151 = scmp.ne.s32.totalorder %s143, %s146
      %p152 = scmp.eq.s32.totalorder %s13, 0
      %p153 = por %p151, %p152
      %p154 = scmp.ne.s32.totalorder %s143, %s146
      %p155 = scmp.eq.s32.totalorder %s18, 1
      %p156 = por %p154, %p155
      %p157 = scmp.ne.s32.totalorder %s146, %s147
      %p158 = scmp.eq.s32.totalorder %s18, 0
      %p159 = por %p157, %p158
      %p160 = scmp.ne.s32.totalorder %s146, %s147
      %p161 = scmp.eq.s32.totalorder %s19, 1
      %p162 = por %p160, %p161
      %p164 = scmp.ne.s32.totalorder %s147, %s163
      %p165 = scmp.eq.s32.totalorder %s19, 0
      %p166 = por %p164, %p165
      %p167 = scmp.le.s32.totalorder 1, %s13
      %p168 = scmp.lt.s32.totalorder %s13, 3
      %p169 = pnand %p167, %p168
      %p170 = pneg %p169
      // Predicated region
      $region9: #{tpu_custom_call.1} parent=5 // pred_check
        _
      $region10: #{tpu_custom_call.1} parent=5 // pred_check_branch
        %172 = sbr.rel (%p169) target = $region12
      $region11: #{tpu_custom_call.1} parent=5 // pred_region
        %s173 = ssub.s32 %s13, 1
        // Predicated region
        $region13: #{tpu_custom_call.1} parent=11 // pred_check
          %p174 = pneg %p79
        $region14: #{tpu_custom_call.1} parent=11 // pred_check_branch
          %176 = sbr.rel (%p174) target = $region16
        $region15: #{tpu_custom_call.1} parent=11 // pred_region
          %p177 = scmp.lt.s32.totalorder %s22, 0
          %s178 = scalar_select %p177, %s22, 0
          %s179 = smul.addr %s178, 5
          %s180 = smul.addr %s179, 8
          %s181 = scalar_lea.vmem %s1, %s180
        $region16: #{tpu_custom_call.1} parent=11 // pred_fallthru
          _
      $region12: #{tpu_custom_call.1} parent=5 // pred_fallthru
        _
      %p182 = scmp.lt.s32.totalorder %s13, 2
      // Predicated region
      $region17: #{tpu_custom_call.1} parent=5 // pred_check
        %p183 = pneg %p182
      $region18: #{tpu_custom_call.1} parent=5 // pred_check_branch
        %185 = sbr.rel (%p183) target = $region20
      $region19: #{tpu_custom_call.1} parent=5 // pred_region
        // Predicated region
        $region21: #{tpu_custom_call.1} parent=19 // pred_check
          %p186 = pneg %p47
        $region22: #{tpu_custom_call.1} parent=19 // pred_check_branch
          %188 = sbr.rel (%p186) target = $region24
        $region23: #{tpu_custom_call.1} parent=19 // pred_region
          %p189 = scmp.lt.s32.totalorder %s20, 0
          %s190 = scalar_select %p189, %s20, 0
          %p191 = scmp.lt.s32.totalorder %s21, 1
          %s192 = scalar_select %p191, %s21, 1
          %s193 = smul.addr %s192, 54
          %s194 = smul.addr %s190, 108
          %s195 = sadd.s32 %s193, %s194
          %s196 = smul.addr %s195, 8
          %s197 = scalar_lea.vmem %s0, %s196
        $region24: #{tpu_custom_call.1} parent=19 // pred_fallthru
          _
      $region20: #{tpu_custom_call.1} parent=5 // pred_fallthru
        _
      %p198 = scmp.le.s32.totalorder 1, %s13
      %p199 = scmp.lt.s32.totalorder %s13, 3
      %p200 = pnand %p198, %p199
      %p201 = pneg %p200
      // Predicated region
      $region25: #{tpu_custom_call.1} parent=5 // pred_check
        _
      $region26: #{tpu_custom_call.1} parent=5 // pred_check_branch
        %203 = sbr.rel (%p200) target = $region28
      $region27: #{tpu_custom_call.1} parent=5 // pred_region
        %s204 = ssub.s32 %s13, 1
        %p205 = scmp.lt.s32.totalorder %s22, 0
        %s206 = scalar_select %p205, %s22, 0
        %p207 = scmp.lt.s32.totalorder %s23, 1
        %s208 = scalar_select %p207, %s23, 1
        %s209 = smul.addr %s208, 54
        %s210 = smul.addr %s206, 108
        %s211 = sadd.s32 %s209, %s210
        %s212 = smul.addr %s211, 8
        %s213 = scalar_lea.vmem %s0, %s212
        %p214 = pneg %p53
        %p215 = pneg %p50
        %p216 = scmp.lt.s32.totalorder %s22, 0
        %s217 = scalar_select %p216, %s22, 0
        %s218 = smul.addr %s217, 5
        %s219 = smul.addr %s218, 8
        %s220 = scalar_lea.vmem %s1, %s219
        %p221 = pneg %p79
        %p222 = pneg %p76
        %p223 = pneg %p107
        %p224 = pneg %p104
        %p225 = scmp.lt.s32.totalorder %s22, 0
        %s226 = scalar_select %p225, %s22, 0
        %p227 = scmp.lt.s32.totalorder %s23, 1
        %s228 = scalar_select %p227, %s23, 1
        %s229 = smul.addr %s228, 32
        %s230 = smul.addr %s226, 64
        %s231 = sadd.s32 %s229, %s230
        %s232 = smul.addr %s231, 8
        %s233 = scalar_lea.vmem %s2, %s232
        %p234 = pneg %p133
        %p235 = pneg %p130
        %p236 = pneg %p159
        %p237 = pneg %p156
        %p238 = scmp.lt.s32.totalorder %s22, 0
        %s239 = scalar_select %p238, %s22, 0
        %p240 = scmp.lt.s32.totalorder %s23, 1
        %s241 = scalar_select %p240, %s23, 1
        %s242 = smul.addr %s241, 54
        %s243 = smul.addr %s239, 108
        %s244 = sadd.s32 %s242, %s243
        %s245 = smul.addr %s244, 8
        %s246 = scalar_lea.vmem %s0, %s245
        %p247 = scmp.lt.s32.totalorder %s22, 0
        %s248 = scalar_select %p247, %s22, 0
        %s249 = smul.addr %s248, 5
        %s250 = smul.addr %s249, 8
        %s251 = scalar_lea.vmem %s1, %s250
        %p252 = scmp.lt.s32.totalorder %s22, 0
        %s253 = scalar_select %p252, %s22, 0
        %p254 = scmp.lt.s32.totalorder %s23, 1
        %s255 = scalar_select %p254, %s23, 1
        %s256 = smul.addr %s255, 32
        %s257 = smul.addr %s253, 64
        %s258 = sadd.s32 %s256, %s257
        %s259 = smul.addr %s258, 8
        %s260 = scalar_lea.vmem %s2, %s259
        %v261 = vld [vmem:[%s246] sm:$0xff]
        %v262 = vld [vmem:[%s246 + $0x8] sm:$0xff]
        %v263 = vld [vmem:[%s246 + $0x10] sm:$0x3]
        %v264 = vld [vmem:[%s246 + $0x18] sm:$0xff]
        %v265 = vld [vmem:[%s246 + $0x20] sm:$0xff]
        %v266 = vld [vmem:[%s246 + $0x28] sm:$0x3]
        %v267 = vld [vmem:[%s246 + $0x30] sm:$0xff]
        %v268 = vld [vmem:[%s246 + $0x38] sm:$0xff]
        %v269 = vld [vmem:[%s246 + $0x40] sm:$0x3]
        %v270 = vld [vmem:[%s246 + $0x48] sm:$0xff]
        %v271 = vld [vmem:[%s246 + $0x50] sm:$0xff]
        %v272 = vld [vmem:[%s246 + $0x58] sm:$0x3]
        %v273 = vld [vmem:[%s246 + $0x60] sm:$0xff]
        %v274 = vld [vmem:[%s246 + $0x68] sm:$0xff]
        %v275 = vld [vmem:[%s246 + $0x70] sm:$0x3]
        %v276 = vld [vmem:[%s246 + $0x78] sm:$0xff]
        %v277 = vld [vmem:[%s246 + $0x80] sm:$0xff]
        %v278 = vld [vmem:[%s246 + $0x88] sm:$0x3]
        %v279 = vld [vmem:[%s246 + $0x90] sm:$0xff]
        %v280 = vld [vmem:[%s246 + $0x98] sm:$0xff]
        %v281 = vld [vmem:[%s246 + $0xa0] sm:$0x3]
        %v282 = vld [vmem:[%s246 + $0xa8] sm:$0xff]
        %v283 = vld [vmem:[%s246 + $0xb0] sm:$0xff]
        %v284 = vld [vmem:[%s246 + $0xb8] sm:$0x3]
        %v285 = vld [vmem:[%s246 + $0xc0] sm:$0xff]
        %v286 = vld [vmem:[%s246 + $0xc8] sm:$0xff]
        %v287 = vld [vmem:[%s246 + $0xd0] sm:$0x3]
        %v288 = vld [vmem:[%s246 + $0xd8] sm:$0xff]
        %v289 = vld [vmem:[%s246 + $0xe0] sm:$0xff]
        %v290 = vld [vmem:[%s246 + $0xe8] sm:$0x3]
        %v291 = vld [vmem:[%s246 + $0xf0] sm:$0xff]
        %v292 = vld [vmem:[%s246 + $0xf8] sm:$0xff]
        %v293 = vld [vmem:[%s246 + $0x100] sm:$0x3]
        %v294 = vld [vmem:[%s246 + $0x108] sm:$0xff]
        %v295 = vld [vmem:[%s246 + $0x110] sm:$0xff]
        %v296 = vld [vmem:[%s246 + $0x118] sm:$0x3]
        %v297 = vld [vmem:[%s246 + $0x120] sm:$0xff]
        %v298 = vld [vmem:[%s246 + $0x128] sm:$0xff]
        %v299 = vld [vmem:[%s246 + $0x130] sm:$0x3]
        %v300 = vld [vmem:[%s246 + $0x138] sm:$0xff]
        %v301 = vld [vmem:[%s246 + $0x140] sm:$0xff]
        %v302 = vld [vmem:[%s246 + $0x148] sm:$0x3]
        %v303 = vld [vmem:[%s246 + $0x150] sm:$0xff]
        %v304 = vld [vmem:[%s246 + $0x158] sm:$0xff]
        %v305 = vld [vmem:[%s246 + $0x160] sm:$0x3]
        %v306 = vld [vmem:[%s246 + $0x168] sm:$0xff]
        %v307 = vld [vmem:[%s246 + $0x170] sm:$0xff]
        %v308 = vld [vmem:[%s246 + $0x178] sm:$0x3]
        %v309 = vld [vmem:[%s246 + $0x180] sm:$0xff]
        %v310 = vld [vmem:[%s246 + $0x188] sm:$0xff]
        %v311 = vld [vmem:[%s246 + $0x190] sm:$0x3]
        %v312 = vld [vmem:[%s246 + $0x198] sm:$0xff]
        %v313 = vld [vmem:[%s246 + $0x1a0] sm:$0xff]
        %v314 = vld [vmem:[%s246 + $0x1a8] sm:$0x3]
        %v315 = vld [vmem:[%s251] sm:$0xff]
        %v316 = vld [vmem:[%s251 + $0x8] sm:$0xff]
        %v317 = vld [vmem:[%s251 + $0x10] sm:$0xff]
        %v318 = vld [vmem:[%s251 + $0x18] sm:$0xff]
        %v319 = vld [vmem:[%s251 + $0x20] sm:$0xf]
        %vm368 = vcmask 1046528
        %v369 = vrot.slane %v261, 1
        %v370 = vrot.slane %v262, 1
        %v371 = vsel %vm368, %v369, %v370
        %v372 = vrot.slane %v263, 1
        %v373 = vsel %vm368, %v370, %v372
        %v374 = vrot.slane %v264, 1
        %v375 = vrot.slane %v265, 1
        %v376 = vsel %vm368, %v374, %v375
        %v377 = vrot.slane %v266, 1
        %v378 = vsel %vm368, %v375, %v377
        %v379 = vrot.slane %v267, 1
        %v380 = vrot.slane %v268, 1
        %v381 = vsel %vm368, %v379, %v380
        %v382 = vrot.slane %v269, 1
        %v383 = vsel %vm368, %v380, %v382
        %v384 = vrot.slane %v270, 1
        %v385 = vrot.slane %v271, 1
        %v386 = vsel %vm368, %v384, %v385
        %v387 = vrot.slane %v272, 1
        %v388 = vsel %vm368, %v385, %v387
        %v389 = vrot.slane %v273, 1
        %v390 = vrot.slane %v274, 1
        %v391 = vsel %vm368, %v389, %v390
        %v392 = vrot.slane %v275, 1
        %v393 = vsel %vm368, %v390, %v392
        %v394 = vrot.slane %v276, 1
        %v395 = vrot.slane %v277, 1
        %v396 = vsel %vm368, %v394, %v395
        %v397 = vrot.slane %v278, 1
        %v398 = vsel %vm368, %v395, %v397
        %v399 = vrot.slane %v279, 1
        %v400 = vrot.slane %v280, 1
        %v401 = vsel %vm368, %v399, %v400
        %v402 = vrot.slane %v281, 1
        %v403 = vsel %vm368, %v400, %v402
        %v404 = vrot.slane %v282, 1
        %v405 = vrot.slane %v283, 1
        %v406 = vsel %vm368, %v404, %v405
        %v407 = vrot.slane %v284, 1
        %v408 = vsel %vm368, %v405, %v407
        %v409 = vrot.slane %v285, 1
        %v410 = vrot.slane %v286, 1
        %v411 = vsel %vm368, %v409, %v410
        %v412 = vrot.slane %v287, 1
        %v413 = vsel %vm368, %v410, %v412
        %v414 = vrot.slane %v288, 1
        %v415 = vrot.slane %v289, 1
        %v416 = vsel %vm368, %v414, %v415
        %v417 = vrot.slane %v290, 1
        %v418 = vsel %vm368, %v415, %v417
        %v419 = vrot.slane %v291, 1
        %v420 = vrot.slane %v292, 1
        %v421 = vsel %vm368, %v419, %v420
        %v422 = vrot.slane %v293, 1
        %v423 = vsel %vm368, %v420, %v422
        %v424 = vrot.slane %v294, 1
        %v425 = vrot.slane %v295, 1
        %v426 = vsel %vm368, %v424, %v425
        %v427 = vrot.slane %v296, 1
        %v428 = vsel %vm368, %v425, %v427
        %v429 = vrot.slane %v297, 1
        %v430 = vrot.slane %v298, 1
        %v431 = vsel %vm368, %v429, %v430
        %v432 = vrot.slane %v299, 1
        %v433 = vsel %vm368, %v430, %v432
        %v434 = vrot.slane %v300, 1
        %v435 = vrot.slane %v301, 1
        %v436 = vsel %vm368, %v434, %v435
        %v437 = vrot.slane %v302, 1
        %v438 = vsel %vm368, %v435, %v437
        %v439 = vrot.slane %v303, 1
        %v440 = vrot.slane %v304, 1
        %v441 = vsel %vm368, %v439, %v440
        %v442 = vrot.slane %v305, 1
        %v443 = vsel %vm368, %v440, %v442
        %v444 = vrot.slane %v306, 1
        %v445 = vrot.slane %v307, 1
        %v446 = vsel %vm368, %v444, %v445
        %v447 = vrot.slane %v308, 1
        %v448 = vsel %vm368, %v445, %v447
        %vm449 = vcmask 1045504
        %v450 = vrot.slane %v261, 2
        %v451 = vrot.slane %v262, 2
        %v452 = vsel %vm449, %v450, %v451
        %v453 = vrot.slane %v263, 2
        %v454 = vsel %vm449, %v451, %v453
        %v455 = vrot.slane %v264, 2
        %v456 = vrot.slane %v265, 2
        %v457 = vsel %vm449, %v455, %v456
        %v458 = vrot.slane %v266, 2
        %v459 = vsel %vm449, %v456, %v458
        %v460 = vrot.slane %v267, 2
        %v461 = vrot.slane %v268, 2
        %v462 = vsel %vm449, %v460, %v461
        %v463 = vrot.slane %v269, 2
        %v464 = vsel %vm449, %v461, %v463
        %v465 = vrot.slane %v270, 2
        %v466 = vrot.slane %v271, 2
        %v467 = vsel %vm449, %v465, %v466
        %v468 = vrot.slane %v272, 2
        %v469 = vsel %vm449, %v466, %v468
        %v470 = vrot.slane %v273, 2
        %v471 = vrot.slane %v274, 2
        %v472 = vsel %vm449, %v470, %v471
        %v473 = vrot.slane %v275, 2
        %v474 = vsel %vm449, %v471, %v473
        %v475 = vrot.slane %v276, 2
        %v476 = vrot.slane %v277, 2
        %v477 = vsel %vm449, %v475, %v476
        %v478 = vrot.slane %v278, 2
        %v479 = vsel %vm449, %v476, %v478
        %v480 = vrot.slane %v279, 2
        %v481 = vrot.slane %v280, 2
        %v482 = vsel %vm449, %v480, %v481
        %v483 = vrot.slane %v281, 2
        %v484 = vsel %vm449, %v481, %v483
        %v485 = vrot.slane %v282, 2
        %v486 = vrot.slane %v283, 2
        %v487 = vsel %vm449, %v485, %v486
        %v488 = vrot.slane %v284, 2
        %v489 = vsel %vm449, %v486, %v488
        %v490 = vrot.slane %v285, 2
        %v491 = vrot.slane %v286, 2
        %v492 = vsel %vm449, %v490, %v491
        %v493 = vrot.slane %v287, 2
        %v494 = vsel %vm449, %v491, %v493
        %v495 = vrot.slane %v288, 2
        %v496 = vrot.slane %v289, 2
        %v497 = vsel %vm449, %v495, %v496
        %v498 = vrot.slane %v290, 2
        %v499 = vsel %vm449, %v496, %v498
        %v500 = vrot.slane %v291, 2
        %v501 = vrot.slane %v292, 2
        %v502 = vsel %vm449, %v500, %v501
        %v503 = vrot.slane %v293, 2
        %v504 = vsel %vm449, %v501, %v503
        %v505 = vrot.slane %v294, 2
        %v506 = vrot.slane %v295, 2
        %v507 = vsel %vm449, %v505, %v506
        %v508 = vrot.slane %v296, 2
        %v509 = vsel %vm449, %v506, %v508
        %v510 = vrot.slane %v297, 2
        %v511 = vrot.slane %v298, 2
        %v512 = vsel %vm449, %v510, %v511
        %v513 = vrot.slane %v299, 2
        %v514 = vsel %vm449, %v511, %v513
        %v515 = vrot.slane %v300, 2
        %v516 = vrot.slane %v301, 2
        %v517 = vsel %vm449, %v515, %v516
        %v518 = vrot.slane %v302, 2
        %v519 = vsel %vm449, %v516, %v518
        %v520 = vrot.slane %v303, 2
        %v521 = vrot.slane %v304, 2
        %v522 = vsel %vm449, %v520, %v521
        %v523 = vrot.slane %v305, 2
        %v524 = vsel %vm449, %v521, %v523
        %v525 = vrot.slane %v306, 2
        %v526 = vrot.slane %v307, 2
        %v527 = vsel %vm449, %v525, %v526
        %v528 = vrot.slane %v308, 2
        %v529 = vsel %vm449, %v526, %v528
        %v533 = vrot.slane %v309, 1
        %v534 = vrot.slane %v310, 1
        %v535 = vsel %vm368, %v533, %v534
        %v536 = vrot.slane %v311, 1
        %v537 = vsel %vm368, %v534, %v536
        %v538 = vrot.slane %v309, 2
        %v539 = vrot.slane %v310, 2
        %v540 = vsel %vm449, %v538, %v539
        %v541 = vrot.slane %v311, 2
        %v542 = vsel %vm449, %v539, %v541
        %v546 = vrot.slane %v312, 1
        %v547 = vrot.slane %v313, 1
        %v548 = vsel %vm368, %v546, %v547
        %v549 = vrot.slane %v314, 1
        %v550 = vsel %vm368, %v547, %v549
        %v551 = vrot.slane %v312, 2
        %v552 = vrot.slane %v313, 2
        %v553 = vsel %vm449, %v551, %v552
        %v554 = vrot.slane %v314, 2
        %v555 = vsel %vm449, %v552, %v554
        %556 = vrot.lane.b32.xlu0 %v371, 4
        %v557 = vpop.permute.xlu0 %556
        %558 = vrot.lane.b32.xlu0 %v373, 4
        %v559 = vpop.permute.xlu0 %558
        %560 = vrot.lane.b32.xlu0 %v376, 4
        %v561 = vpop.permute.xlu0 %560
        %562 = vrot.lane.b32.xlu0 %v378, 4
        %v563 = vpop.permute.xlu0 %562
        %564 = vrot.lane.b32.xlu0 %v381, 4
        %v565 = vpop.permute.xlu0 %564
        %566 = vrot.lane.b32.xlu0 %v383, 4
        %v567 = vpop.permute.xlu0 %566
        %568 = vrot.lane.b32.xlu0 %v386, 4
        %v569 = vpop.permute.xlu0 %568
        %570 = vrot.lane.b32.xlu0 %v388, 4
        %v571 = vpop.permute.xlu0 %570
        %572 = vrot.lane.b32.xlu0 %v391, 4
        %v573 = vpop.permute.xlu0 %572
        %574 = vrot.lane.b32.xlu0 %v393, 4
        %v575 = vpop.permute.xlu0 %574
        %576 = vrot.lane.b32.xlu0 %v396, 4
        %v577 = vpop.permute.xlu0 %576
        %578 = vrot.lane.b32.xlu0 %v398, 4
        %v579 = vpop.permute.xlu0 %578
        %580 = vrot.lane.b32.xlu0 %v401, 4
        %v581 = vpop.permute.xlu0 %580
        %582 = vrot.lane.b32.xlu0 %v403, 4
        %v583 = vpop.permute.xlu0 %582
        %584 = vrot.lane.b32.xlu0 %v406, 4
        %v585 = vpop.permute.xlu0 %584
        %586 = vrot.lane.b32.xlu0 %v408, 4
        %v587 = vpop.permute.xlu0 %586
        %588 = vrot.lane.b32.xlu0 %v411, 4
        %v589 = vpop.permute.xlu0 %588
        %590 = vrot.lane.b32.xlu0 %v413, 4
        %v591 = vpop.permute.xlu0 %590
        %592 = vrot.lane.b32.xlu0 %v416, 4
        %v593 = vpop.permute.xlu0 %592
        %594 = vrot.lane.b32.xlu0 %v418, 4
        %v595 = vpop.permute.xlu0 %594
        %596 = vrot.lane.b32.xlu0 %v421, 4
        %v597 = vpop.permute.xlu0 %596
        %598 = vrot.lane.b32.xlu0 %v423, 4
        %v599 = vpop.permute.xlu0 %598
        %600 = vrot.lane.b32.xlu0 %v426, 4
        %v601 = vpop.permute.xlu0 %600
        %602 = vrot.lane.b32.xlu0 %v428, 4
        %v603 = vpop.permute.xlu0 %602
        %604 = vrot.lane.b32.xlu0 %v431, 4
        %v605 = vpop.permute.xlu0 %604
        %606 = vrot.lane.b32.xlu0 %v433, 4
        %v607 = vpop.permute.xlu0 %606
        %608 = vrot.lane.b32.xlu0 %v436, 4
        %v609 = vpop.permute.xlu0 %608
        %610 = vrot.lane.b32.xlu0 %v438, 4
        %v611 = vpop.permute.xlu0 %610
        %612 = vrot.lane.b32.xlu0 %v441, 4
        %v613 = vpop.permute.xlu0 %612
        %614 = vrot.lane.b32.xlu0 %v443, 4
        %v615 = vpop.permute.xlu0 %614
        %616 = vrot.lane.b32.xlu0 %v446, 4
        %v617 = vpop.permute.xlu0 %616
        %618 = vrot.lane.b32.xlu0 %v448, 4
        %v619 = vpop.permute.xlu0 %618
        %652 = vrot.lane.b32.xlu0 %v452, 8
        %v653 = vpop.permute.xlu0 %652
        %654 = vrot.lane.b32.xlu0 %v454, 8
        %v655 = vpop.permute.xlu0 %654
        %656 = vrot.lane.b32.xlu0 %v457, 8
        %v657 = vpop.permute.xlu0 %656
        %658 = vrot.lane.b32.xlu0 %v459, 8
        %v659 = vpop.permute.xlu0 %658
        %660 = vrot.lane.b32.xlu0 %v462, 8
        %v661 = vpop.permute.xlu0 %660
        %662 = vrot.lane.b32.xlu0 %v464, 8
        %v663 = vpop.permute.xlu0 %662
        %664 = vrot.lane.b32.xlu0 %v467, 8
        %v665 = vpop.permute.xlu0 %664
        %666 = vrot.lane.b32.xlu0 %v469, 8
        %v667 = vpop.permute.xlu0 %666
        %668 = vrot.lane.b32.xlu0 %v472, 8
        %v669 = vpop.permute.xlu0 %668
        %670 = vrot.lane.b32.xlu0 %v474, 8
        %v671 = vpop.permute.xlu0 %670
        %672 = vrot.lane.b32.xlu0 %v477, 8
        %v673 = vpop.permute.xlu0 %672
        %674 = vrot.lane.b32.xlu0 %v479, 8
        %v675 = vpop.permute.xlu0 %674
        %676 = vrot.lane.b32.xlu0 %v482, 8
        %v677 = vpop.permute.xlu0 %676
        %678 = vrot.lane.b32.xlu0 %v484, 8
        %v679 = vpop.permute.xlu0 %678
        %680 = vrot.lane.b32.xlu0 %v487, 8
        %v681 = vpop.permute.xlu0 %680
        %682 = vrot.lane.b32.xlu0 %v489, 8
        %v683 = vpop.permute.xlu0 %682
        %684 = vrot.lane.b32.xlu0 %v492, 8
        %v685 = vpop.permute.xlu0 %684
        %686 = vrot.lane.b32.xlu0 %v494, 8
        %v687 = vpop.permute.xlu0 %686
        %688 = vrot.lane.b32.xlu0 %v497, 8
        %v689 = vpop.permute.xlu0 %688
        %690 = vrot.lane.b32.xlu0 %v499, 8
        %v691 = vpop.permute.xlu0 %690
        %692 = vrot.lane.b32.xlu0 %v502, 8
        %v693 = vpop.permute.xlu0 %692
        %694 = vrot.lane.b32.xlu0 %v504, 8
        %v695 = vpop.permute.xlu0 %694
        %696 = vrot.lane.b32.xlu0 %v507, 8
        %v697 = vpop.permute.xlu0 %696
        %698 = vrot.lane.b32.xlu0 %v509, 8
        %v699 = vpop.permute.xlu0 %698
        %700 = vrot.lane.b32.xlu0 %v512, 8
        %v701 = vpop.permute.xlu0 %700
        %702 = vrot.lane.b32.xlu0 %v514, 8
        %v703 = vpop.permute.xlu0 %702
        %704 = vrot.lane.b32.xlu0 %v517, 8
        %v705 = vpop.permute.xlu0 %704
        %706 = vrot.lane.b32.xlu0 %v519, 8
        %v707 = vpop.permute.xlu0 %706
        %708 = vrot.lane.b32.xlu0 %v522, 8
        %v709 = vpop.permute.xlu0 %708
        %710 = vrot.lane.b32.xlu0 %v524, 8
        %v711 = vpop.permute.xlu0 %710
        %712 = vrot.lane.b32.xlu0 %v527, 8
        %v713 = vpop.permute.xlu0 %712
        %714 = vrot.lane.b32.xlu0 %v529, 8
        %v715 = vpop.permute.xlu0 %714
        %748 = vrot.lane.b32.xlu0 %v264, 12
        %v749 = vpop.permute.xlu0 %748
        %750 = vrot.lane.b32.xlu0 %v265, 12
        %v751 = vpop.permute.xlu0 %750
        %752 = vrot.lane.b32.xlu0 %v267, 12
        %v753 = vpop.permute.xlu0 %752
        %754 = vrot.lane.b32.xlu0 %v268, 12
        %v755 = vpop.permute.xlu0 %754
        %756 = vrot.lane.b32.xlu0 %v270, 12
        %v757 = vpop.permute.xlu0 %756
        %758 = vrot.lane.b32.xlu0 %v271, 12
        %v759 = vpop.permute.xlu0 %758
        %760 = vrot.lane.b32.xlu0 %v273, 12
        %v761 = vpop.permute.xlu0 %760
        %762 = vrot.lane.b32.xlu0 %v274, 12
        %v763 = vpop.permute.xlu0 %762
        %764 = vrot.lane.b32.xlu0 %v276, 12
        %v765 = vpop.permute.xlu0 %764
        %766 = vrot.lane.b32.xlu0 %v277, 12
        %v767 = vpop.permute.xlu0 %766
        %768 = vrot.lane.b32.xlu0 %v279, 12
        %v769 = vpop.permute.xlu0 %768
        %770 = vrot.lane.b32.xlu0 %v280, 12
        %v771 = vpop.permute.xlu0 %770
        %772 = vrot.lane.b32.xlu0 %v282, 12
        %v773 = vpop.permute.xlu0 %772
        %774 = vrot.lane.b32.xlu0 %v283, 12
        %v775 = vpop.permute.xlu0 %774
        %776 = vrot.lane.b32.xlu0 %v285, 12
        %v777 = vpop.permute.xlu0 %776
        %778 = vrot.lane.b32.xlu0 %v286, 12
        %v779 = vpop.permute.xlu0 %778
        %780 = vrot.lane.b32.xlu0 %v288, 12
        %v781 = vpop.permute.xlu0 %780
        %782 = vrot.lane.b32.xlu0 %v289, 12
        %v783 = vpop.permute.xlu0 %782
        %784 = vrot.lane.b32.xlu0 %v291, 12
        %v785 = vpop.permute.xlu0 %784
        %786 = vrot.lane.b32.xlu0 %v292, 12
        %v787 = vpop.permute.xlu0 %786
        %788 = vrot.lane.b32.xlu0 %v294, 12
        %v789 = vpop.permute.xlu0 %788
        %790 = vrot.lane.b32.xlu0 %v295, 12
        %v791 = vpop.permute.xlu0 %790
        %792 = vrot.lane.b32.xlu0 %v297, 12
        %v793 = vpop.permute.xlu0 %792
        %794 = vrot.lane.b32.xlu0 %v298, 12
        %v795 = vpop.permute.xlu0 %794
        %796 = vrot.lane.b32.xlu0 %v300, 12
        %v797 = vpop.permute.xlu0 %796
        %798 = vrot.lane.b32.xlu0 %v301, 12
        %v799 = vpop.permute.xlu0 %798
        %800 = vrot.lane.b32.xlu0 %v303, 12
        %v801 = vpop.permute.xlu0 %800
        %802 = vrot.lane.b32.xlu0 %v304, 12
        %v803 = vpop.permute.xlu0 %802
        %804 = vrot.lane.b32.xlu0 %v306, 12
        %v805 = vpop.permute.xlu0 %804
        %806 = vrot.lane.b32.xlu0 %v307, 12
        %v807 = vpop.permute.xlu0 %806
        %808 = vrot.lane.b32.xlu0 %v309, 12
        %v809 = vpop.permute.xlu0 %808
        %810 = vrot.lane.b32.xlu0 %v310, 12
        %v811 = vpop.permute.xlu0 %810
        %844 = vrot.lane.b32.xlu0 %v376, 16
        %v845 = vpop.permute.xlu0 %844
        %846 = vrot.lane.b32.xlu0 %v378, 16
        %v847 = vpop.permute.xlu0 %846
        %848 = vrot.lane.b32.xlu0 %v381, 16
        %v849 = vpop.permute.xlu0 %848
        %850 = vrot.lane.b32.xlu0 %v383, 16
        %v851 = vpop.permute.xlu0 %850
        %852 = vrot.lane.b32.xlu0 %v386, 16
        %v853 = vpop.permute.xlu0 %852
        %854 = vrot.lane.b32.xlu0 %v388, 16
        %v855 = vpop.permute.xlu0 %854
        %856 = vrot.lane.b32.xlu0 %v391, 16
        %v857 = vpop.permute.xlu0 %856
        %858 = vrot.lane.b32.xlu0 %v393, 16
        %v859 = vpop.permute.xlu0 %858
        %860 = vrot.lane.b32.xlu0 %v396, 16
        %v861 = vpop.permute.xlu0 %860
        %862 = vrot.lane.b32.xlu0 %v398, 16
        %v863 = vpop.permute.xlu0 %862
        %864 = vrot.lane.b32.xlu0 %v401, 16
        %v865 = vpop.permute.xlu0 %864
        %866 = vrot.lane.b32.xlu0 %v403, 16
        %v867 = vpop.permute.xlu0 %866
        %868 = vrot.lane.b32.xlu0 %v406, 16
        %v869 = vpop.permute.xlu0 %868
        %870 = vrot.lane.b32.xlu0 %v408, 16
        %v871 = vpop.permute.xlu0 %870
        %872 = vrot.lane.b32.xlu0 %v411, 16
        %v873 = vpop.permute.xlu0 %872
        %874 = vrot.lane.b32.xlu0 %v413, 16
        %v875 = vpop.permute.xlu0 %874
        %876 = vrot.lane.b32.xlu0 %v416, 16
        %v877 = vpop.permute.xlu0 %876
        %878 = vrot.lane.b32.xlu0 %v418, 16
        %v879 = vpop.permute.xlu0 %878
        %880 = vrot.lane.b32.xlu0 %v421, 16
        %v881 = vpop.permute.xlu0 %880
        %882 = vrot.lane.b32.xlu0 %v423, 16
        %v883 = vpop.permute.xlu0 %882
        %884 = vrot.lane.b32.xlu0 %v426, 16
        %v885 = vpop.permute.xlu0 %884
        %886 = vrot.lane.b32.xlu0 %v428, 16
        %v887 = vpop.permute.xlu0 %886
        %888 = vrot.lane.b32.xlu0 %v431, 16
        %v889 = vpop.permute.xlu0 %888
        %890 = vrot.lane.b32.xlu0 %v433, 16
        %v891 = vpop.permute.xlu0 %890
        %892 = vrot.lane.b32.xlu0 %v436, 16
        %v893 = vpop.permute.xlu0 %892
        %894 = vrot.lane.b32.xlu0 %v438, 16
        %v895 = vpop.permute.xlu0 %894
        %896 = vrot.lane.b32.xlu0 %v441, 16
        %v897 = vpop.permute.xlu0 %896
        %898 = vrot.lane.b32.xlu0 %v443, 16
        %v899 = vpop.permute.xlu0 %898
        %900 = vrot.lane.b32.xlu0 %v446, 16
        %v901 = vpop.permute.xlu0 %900
        %902 = vrot.lane.b32.xlu0 %v448, 16
        %v903 = vpop.permute.xlu0 %902
        %904 = vrot.lane.b32.xlu0 %v535, 16
        %v905 = vpop.permute.xlu0 %904
        %906 = vrot.lane.b32.xlu0 %v537, 16
        %v907 = vpop.permute.xlu0 %906
        %940 = vrot.lane.b32.xlu0 %v457, 20
        %v941 = vpop.permute.xlu0 %940
        %942 = vrot.lane.b32.xlu0 %v459, 20
        %v943 = vpop.permute.xlu0 %942
        %944 = vrot.lane.b32.xlu0 %v462, 20
        %v945 = vpop.permute.xlu0 %944
        %946 = vrot.lane.b32.xlu0 %v464, 20
        %v947 = vpop.permute.xlu0 %946
        %948 = vrot.lane.b32.xlu0 %v467, 20
        %v949 = vpop.permute.xlu0 %948
        %950 = vrot.lane.b32.xlu0 %v469, 20
        %v951 = vpop.permute.xlu0 %950
        %952 = vrot.lane.b32.xlu0 %v472, 20
        %v953 = vpop.permute.xlu0 %952
        %954 = vrot.lane.b32.xlu0 %v474, 20
        %v955 = vpop.permute.xlu0 %954
        %956 = vrot.lane.b32.xlu0 %v477, 20
        %v957 = vpop.permute.xlu0 %956
        %958 = vrot.lane.b32.xlu0 %v479, 20
        %v959 = vpop.permute.xlu0 %958
        %960 = vrot.lane.b32.xlu0 %v482, 20
        %v961 = vpop.permute.xlu0 %960
        %962 = vrot.lane.b32.xlu0 %v484, 20
        %v963 = vpop.permute.xlu0 %962
        %964 = vrot.lane.b32.xlu0 %v487, 20
        %v965 = vpop.permute.xlu0 %964
        %966 = vrot.lane.b32.xlu0 %v489, 20
        %v967 = vpop.permute.xlu0 %966
        %968 = vrot.lane.b32.xlu0 %v492, 20
        %v969 = vpop.permute.xlu0 %968
        %970 = vrot.lane.b32.xlu0 %v494, 20
        %v971 = vpop.permute.xlu0 %970
        %972 = vrot.lane.b32.xlu0 %v497, 20
        %v973 = vpop.permute.xlu0 %972
        %974 = vrot.lane.b32.xlu0 %v499, 20
        %v975 = vpop.permute.xlu0 %974
        %976 = vrot.lane.b32.xlu0 %v502, 20
        %v977 = vpop.permute.xlu0 %976
        %978 = vrot.lane.b32.xlu0 %v504, 20
        %v979 = vpop.permute.xlu0 %978
        %980 = vrot.lane.b32.xlu0 %v507, 20
        %v981 = vpop.permute.xlu0 %980
        %982 = vrot.lane.b32.xlu0 %v509, 20
        %v983 = vpop.permute.xlu0 %982
        %984 = vrot.lane.b32.xlu0 %v512, 20
        %v985 = vpop.permute.xlu0 %984
        %986 = vrot.lane.b32.xlu0 %v514, 20
        %v987 = vpop.permute.xlu0 %986
        %988 = vrot.lane.b32.xlu0 %v517, 20
        %v989 = vpop.permute.xlu0 %988
        %990 = vrot.lane.b32.xlu0 %v519, 20
        %v991 = vpop.permute.xlu0 %990
        %992 = vrot.lane.b32.xlu0 %v522, 20
        %v993 = vpop.permute.xlu0 %992
        %994 = vrot.lane.b32.xlu0 %v524, 20
        %v995 = vpop.permute.xlu0 %994
        %996 = vrot.lane.b32.xlu0 %v527, 20
        %v997 = vpop.permute.xlu0 %996
        %998 = vrot.lane.b32.xlu0 %v529, 20
        %v999 = vpop.permute.xlu0 %998
        %1000 = vrot.lane.b32.xlu0 %v540, 20
        %v1001 = vpop.permute.xlu0 %1000
        %1002 = vrot.lane.b32.xlu0 %v542, 20
        %v1003 = vpop.permute.xlu0 %1002
        %1036 = vrot.lane.b32.xlu0 %v267, 24
        %v1037 = vpop.permute.xlu0 %1036
        %1038 = vrot.lane.b32.xlu0 %v268, 24
        %v1039 = vpop.permute.xlu0 %1038
        %1040 = vrot.lane.b32.xlu0 %v270, 24
        %v1041 = vpop.permute.xlu0 %1040
        %1042 = vrot.lane.b32.xlu0 %v271, 24
        %v1043 = vpop.permute.xlu0 %1042
        %1044 = vrot.lane.b32.xlu0 %v273, 24
        %v1045 = vpop.permute.xlu0 %1044
        %1046 = vrot.lane.b32.xlu0 %v274, 24
        %v1047 = vpop.permute.xlu0 %1046
        %1048 = vrot.lane.b32.xlu0 %v276, 24
        %v1049 = vpop.permute.xlu0 %1048
        %1050 = vrot.lane.b32.xlu0 %v277, 24
        %v1051 = vpop.permute.xlu0 %1050
        %1052 = vrot.lane.b32.xlu0 %v279, 24
        %v1053 = vpop.permute.xlu0 %1052
        %1054 = vrot.lane.b32.xlu0 %v280, 24
        %v1055 = vpop.permute.xlu0 %1054
        %1056 = vrot.lane.b32.xlu0 %v282, 24
        %v1057 = vpop.permute.xlu0 %1056
        %1058 = vrot.lane.b32.xlu0 %v283, 24
        %v1059 = vpop.permute.xlu0 %1058
        %1060 = vrot.lane.b32.xlu0 %v285, 24
        %v1061 = vpop.permute.xlu0 %1060
        %1062 = vrot.lane.b32.xlu0 %v286, 24
        %v1063 = vpop.permute.xlu0 %1062
        %1064 = vrot.lane.b32.xlu0 %v288, 24
        %v1065 = vpop.permute.xlu0 %1064
        %1066 = vrot.lane.b32.xlu0 %v289, 24
        %v1067 = vpop.permute.xlu0 %1066
        %1068 = vrot.lane.b32.xlu0 %v291, 24
        %v1069 = vpop.permute.xlu0 %1068
        %1070 = vrot.lane.b32.xlu0 %v292, 24
        %v1071 = vpop.permute.xlu0 %1070
        %1072 = vrot.lane.b32.xlu0 %v294, 24
        %v1073 = vpop.permute.xlu0 %1072
        %1074 = vrot.lane.b32.xlu0 %v295, 24
        %v1075 = vpop.permute.xlu0 %1074
        %1076 = vrot.lane.b32.xlu0 %v297, 24
        %v1077 = vpop.permute.xlu0 %1076
        %1078 = vrot.lane.b32.xlu0 %v298, 24
        %v1079 = vpop.permute.xlu0 %1078
        %1080 = vrot.lane.b32.xlu0 %v300, 24
        %v1081 = vpop.permute.xlu0 %1080
        %1082 = vrot.lane.b32.xlu0 %v301, 24
        %v1083 = vpop.permute.xlu0 %1082
        %1084 = vrot.lane.b32.xlu0 %v303, 24
        %v1085 = vpop.permute.xlu0 %1084
        %1086 = vrot.lane.b32.xlu0 %v304, 24
        %v1087 = vpop.permute.xlu0 %1086
        %1088 = vrot.lane.b32.xlu0 %v306, 24
        %v1089 = vpop.permute.xlu0 %1088
        %1090 = vrot.lane.b32.xlu0 %v307, 24
        %v1091 = vpop.permute.xlu0 %1090
        %1092 = vrot.lane.b32.xlu0 %v309, 24
        %v1093 = vpop.permute.xlu0 %1092
        %1094 = vrot.lane.b32.xlu0 %v310, 24
        %v1095 = vpop.permute.xlu0 %1094
        %1096 = vrot.lane.b32.xlu0 %v312, 24
        %v1097 = vpop.permute.xlu0 %1096
        %1098 = vrot.lane.b32.xlu0 %v313, 24
        %v1099 = vpop.permute.xlu0 %1098
        %1132 = vrot.lane.b32.xlu0 %v381, 28
        %v1133 = vpop.permute.xlu0 %1132
        %1134 = vrot.lane.b32.xlu0 %v383, 28
        %v1135 = vpop.permute.xlu0 %1134
        %1136 = vrot.lane.b32.xlu0 %v386, 28
        %v1137 = vpop.permute.xlu0 %1136
        %1138 = vrot.lane.b32.xlu0 %v388, 28
        %v1139 = vpop.permute.xlu0 %1138
        %1140 = vrot.lane.b32.xlu0 %v391, 28
        %v1141 = vpop.permute.xlu0 %1140
        %1142 = vrot.lane.b32.xlu0 %v393, 28
        %v1143 = vpop.permute.xlu0 %1142
        %1144 = vrot.lane.b32.xlu0 %v396, 28
        %v1145 = vpop.permute.xlu0 %1144
        %1146 = vrot.lane.b32.xlu0 %v398, 28
        %v1147 = vpop.permute.xlu0 %1146
        %1148 = vrot.lane.b32.xlu0 %v401, 28
        %v1149 = vpop.permute.xlu0 %1148
        %1150 = vrot.lane.b32.xlu0 %v403, 28
        %v1151 = vpop.permute.xlu0 %1150
        %1152 = vrot.lane.b32.xlu0 %v406, 28
        %v1153 = vpop.permute.xlu0 %1152
        %1154 = vrot.lane.b32.xlu0 %v408, 28
        %v1155 = vpop.permute.xlu0 %1154
        %1156 = vrot.lane.b32.xlu0 %v411, 28
        %v1157 = vpop.permute.xlu0 %1156
        %1158 = vrot.lane.b32.xlu0 %v413, 28
        %v1159 = vpop.permute.xlu0 %1158
        %1160 = vrot.lane.b32.xlu0 %v416, 28
        %v1161 = vpop.permute.xlu0 %1160
        %1162 = vrot.lane.b32.xlu0 %v418, 28
        %v1163 = vpop.permute.xlu0 %1162
        %1164 = vrot.lane.b32.xlu0 %v421, 28
        %v1165 = vpop.permute.xlu0 %1164
        %1166 = vrot.lane.b32.xlu0 %v423, 28
        %v1167 = vpop.permute.xlu0 %1166
        %1168 = vrot.lane.b32.xlu0 %v426, 28
        %v1169 = vpop.permute.xlu0 %1168
        %1170 = vrot.lane.b32.xlu0 %v428, 28
        %v1171 = vpop.permute.xlu0 %1170
        %1172 = vrot.lane.b32.xlu0 %v431, 28
        %v1173 = vpop.permute.xlu0 %1172
        %1174 = vrot.lane.b32.xlu0 %v433, 28
        %v1175 = vpop.permute.xlu0 %1174
        %1176 = vrot.lane.b32.xlu0 %v436, 28
        %v1177 = vpop.permute.xlu0 %1176
        %1178 = vrot.lane.b32.xlu0 %v438, 28
        %v1179 = vpop.permute.xlu0 %1178
        %1180 = vrot.lane.b32.xlu0 %v441, 28
        %v1181 = vpop.permute.xlu0 %1180
        %1182 = vrot.lane.b32.xlu0 %v443, 28
        %v1183 = vpop.permute.xlu0 %1182
        %1184 = vrot.lane.b32.xlu0 %v446, 28
        %v1185 = vpop.permute.xlu0 %1184
        %1186 = vrot.lane.b32.xlu0 %v448, 28
        %v1187 = vpop.permute.xlu0 %1186
        %1188 = vrot.lane.b32.xlu0 %v535, 28
        %v1189 = vpop.permute.xlu0 %1188
        %1190 = vrot.lane.b32.xlu0 %v537, 28
        %v1191 = vpop.permute.xlu0 %1190
        %1192 = vrot.lane.b32.xlu0 %v548, 28
        %v1193 = vpop.permute.xlu0 %1192
        %1194 = vrot.lane.b32.xlu0 %v550, 28
        %v1195 = vpop.permute.xlu0 %1194
        %1228 = vrot.lane.b32.xlu0 %v462, 32
        %v1229 = vpop.permute.xlu0 %1228
        %1230 = vrot.lane.b32.xlu0 %v464, 32
        %v1231 = vpop.permute.xlu0 %1230
        %1232 = vrot.lane.b32.xlu0 %v467, 32
        %v1233 = vpop.permute.xlu0 %1232
        %1234 = vrot.lane.b32.xlu0 %v469, 32
        %v1235 = vpop.permute.xlu0 %1234
        %1236 = vrot.lane.b32.xlu0 %v472, 32
        %v1237 = vpop.permute.xlu0 %1236
        %1238 = vrot.lane.b32.xlu0 %v474, 32
        %v1239 = vpop.permute.xlu0 %1238
        %1240 = vrot.lane.b32.xlu0 %v477, 32
        %v1241 = vpop.permute.xlu0 %1240
        %1242 = vrot.lane.b32.xlu0 %v479, 32
        %v1243 = vpop.permute.xlu0 %1242
        %1244 = vrot.lane.b32.xlu0 %v482, 32
        %v1245 = vpop.permute.xlu0 %1244
        %1246 = vrot.lane.b32.xlu0 %v484, 32
        %v1247 = vpop.permute.xlu0 %1246
        %1248 = vrot.lane.b32.xlu0 %v487, 32
        %v1249 = vpop.permute.xlu0 %1248
        %1250 = vrot.lane.b32.xlu0 %v489, 32
        %v1251 = vpop.permute.xlu0 %1250
        %1252 = vrot.lane.b32.xlu0 %v492, 32
        %v1253 = vpop.permute.xlu0 %1252
        %1254 = vrot.lane.b32.xlu0 %v494, 32
        %v1255 = vpop.permute.xlu0 %1254
        %1256 = vrot.lane.b32.xlu0 %v497, 32
        %v1257 = vpop.permute.xlu0 %1256
        %1258 = vrot.lane.b32.xlu0 %v499, 32
        %v1259 = vpop.permute.xlu0 %1258
        %1260 = vrot.lane.b32.xlu0 %v502, 32
        %v1261 = vpop.permute.xlu0 %1260
        %1262 = vrot.lane.b32.xlu0 %v504, 32
        %v1263 = vpop.permute.xlu0 %1262
        %1264 = vrot.lane.b32.xlu0 %v507, 32
        %v1265 = vpop.permute.xlu0 %1264
        %1266 = vrot.lane.b32.xlu0 %v509, 32
        %v1267 = vpop.permute.xlu0 %1266
        %1268 = vrot.lane.b32.xlu0 %v512, 32
        %v1269 = vpop.permute.xlu0 %1268
        %1270 = vrot.lane.b32.xlu0 %v514, 32
        %v1271 = vpop.permute.xlu0 %1270
        %1272 = vrot.lane.b32.xlu0 %v517, 32
        %v1273 = vpop.permute.xlu0 %1272
        %1274 = vrot.lane.b32.xlu0 %v519, 32
        %v1275 = vpop.permute.xlu0 %1274
        %1276 = vrot.lane.b32.xlu0 %v522, 32
        %v1277 = vpop.permute.xlu0 %1276
        %1278 = vrot.lane.b32.xlu0 %v524, 32
        %v1279 = vpop.permute.xlu0 %1278
        %1280 = vrot.lane.b32.xlu0 %v527, 32
        %v1281 = vpop.permute.xlu0 %1280
        %1282 = vrot.lane.b32.xlu0 %v529, 32
        %v1283 = vpop.permute.xlu0 %1282
        %1284 = vrot.lane.b32.xlu0 %v540, 32
        %v1285 = vpop.permute.xlu0 %1284
        %1286 = vrot.lane.b32.xlu0 %v542, 32
        %v1287 = vpop.permute.xlu0 %1286
        %1288 = vrot.lane.b32.xlu0 %v553, 32
        %v1289 = vpop.permute.xlu0 %1288
        %1290 = vrot.lane.b32.xlu0 %v555, 32
        %v1291 = vpop.permute.xlu0 %1290
        %vm1324 = vcmask 31744
        %v1325 = vsel %vm1324, %v261, %v557
        %v1326 = vsel %vm1324, %v262, %v559
        %v1327 = vsel %vm1324, %v264, %v561
        %v1328 = vsel %vm1324, %v265, %v563
        %v1329 = vsel %vm1324, %v267, %v565
        %v1330 = vsel %vm1324, %v268, %v567
        %v1331 = vsel %vm1324, %v270, %v569
        %v1332 = vsel %vm1324, %v271, %v571
        %v1333 = vsel %vm1324, %v273, %v573
        %v1334 = vsel %vm1324, %v274, %v575
        %v1335 = vsel %vm1324, %v276, %v577
        %v1336 = vsel %vm1324, %v277, %v579
        %v1337 = vsel %vm1324, %v279, %v581
        %v1338 = vsel %vm1324, %v280, %v583
        %v1339 = vsel %vm1324, %v282, %v585
        %v1340 = vsel %vm1324, %v283, %v587
        %v1341 = vsel %vm1324, %v285, %v589
        %v1342 = vsel %vm1324, %v286, %v591
        %v1343 = vsel %vm1324, %v288, %v593
        %v1344 = vsel %vm1324, %v289, %v595
        %v1345 = vsel %vm1324, %v291, %v597
        %v1346 = vsel %vm1324, %v292, %v599
        %v1347 = vsel %vm1324, %v294, %v601
        %v1348 = vsel %vm1324, %v295, %v603
        %v1349 = vsel %vm1324, %v297, %v605
        %v1350 = vsel %vm1324, %v298, %v607
        %v1351 = vsel %vm1324, %v300, %v609
        %v1352 = vsel %vm1324, %v301, %v611
        %v1353 = vsel %vm1324, %v303, %v613
        %v1354 = vsel %vm1324, %v304, %v615
        %v1355 = vsel %vm1324, %v306, %v617
        %v1356 = vsel %vm1324, %v307, %v619
        %vm1357 = vcmask 64512
        %v1358 = vsel %vm1357, %v1325, %v653
        %v1359 = vsel %vm1357, %v1326, %v655
        %v1360 = vsel %vm1357, %v1327, %v657
        %v1361 = vsel %vm1357, %v1328, %v659
        %v1362 = vsel %vm1357, %v1329, %v661
        %v1363 = vsel %vm1357, %v1330, %v663
        %v1364 = vsel %vm1357, %v1331, %v665
        %v1365 = vsel %vm1357, %v1332, %v667
        %v1366 = vsel %vm1357, %v1333, %v669
        %v1367 = vsel %vm1357, %v1334, %v671
        %v1368 = vsel %vm1357, %v1335, %v673
        %v1369 = vsel %vm1357, %v1336, %v675
        %v1370 = vsel %vm1357, %v1337, %v677
        %v1371 = vsel %vm1357, %v1338, %v679
        %v1372 = vsel %vm1357, %v1339, %v681
        %v1373 = vsel %vm1357, %v1340, %v683
        %v1374 = vsel %vm1357, %v1341, %v685
        %v1375 = vsel %vm1357, %v1342, %v687
        %v1376 = vsel %vm1357, %v1343, %v689
        %v1377 = vsel %vm1357, %v1344, %v691
        %v1378 = vsel %vm1357, %v1345, %v693
        %v1379 = vsel %vm1357, %v1346, %v695
        %v1380 = vsel %vm1357, %v1347, %v697
        %v1381 = vsel %vm1357, %v1348, %v699
        %v1382 = vsel %vm1357, %v1349, %v701
        %v1383 = vsel %vm1357, %v1350, %v703
        %v1384 = vsel %vm1357, %v1351, %v705
        %v1385 = vsel %vm1357, %v1352, %v707
        %v1386 = vsel %vm1357, %v1353, %v709
        %v1387 = vsel %vm1357, %v1354, %v711
        %v1388 = vsel %vm1357, %v1355, %v713
        %v1389 = vsel %vm1357, %v1356, %v715
        %vm1390 = vcmask 97280
        %v1391 = vsel %vm1390, %v1358, %v749
        %v1392 = vsel %vm1390, %v1359, %v751
        %v1393 = vsel %vm1390, %v1360, %v753
        %v1394 = vsel %vm1390, %v1361, %v755
        %v1395 = vsel %vm1390, %v1362, %v757
        %v1396 = vsel %vm1390, %v1363, %v759
        %v1397 = vsel %vm1390, %v1364, %v761
        %v1398 = vsel %vm1390, %v1365, %v763
        %v1399 = vsel %vm1390, %v1366, %v765
        %v1400 = vsel %vm1390, %v1367, %v767
        %v1401 = vsel %vm1390, %v1368, %v769
        %v1402 = vsel %vm1390, %v1369, %v771
        %v1403 = vsel %vm1390, %v1370, %v773
        %v1404 = vsel %vm1390, %v1371, %v775
        %v1405 = vsel %vm1390, %v1372, %v777
        %v1406 = vsel %vm1390, %v1373, %v779
        %v1407 = vsel %vm1390, %v1374, %v781
        %v1408 = vsel %vm1390, %v1375, %v783
        %v1409 = vsel %vm1390, %v1376, %v785
        %v1410 = vsel %vm1390, %v1377, %v787
        %v1411 = vsel %vm1390, %v1378, %v789
        %v1412 = vsel %vm1390, %v1379, %v791
        %v1413 = vsel %vm1390, %v1380, %v793
        %v1414 = vsel %vm1390, %v1381, %v795
        %v1415 = vsel %vm1390, %v1382, %v797
        %v1416 = vsel %vm1390, %v1383, %v799
        %v1417 = vsel %vm1390, %v1384, %v801
        %v1418 = vsel %vm1390, %v1385, %v803
        %v1419 = vsel %vm1390, %v1386, %v805
        %v1420 = vsel %vm1390, %v1387, %v807
        %v1421 = vsel %vm1390, %v1388, %v809
        %v1422 = vsel %vm1390, %v1389, %v811
        %vm1423 = vcmask 130048
        %v1424 = vsel %vm1423, %v1391, %v845
        %v1425 = vsel %vm1423, %v1392, %v847
        %v1426 = vsel %vm1423, %v1393, %v849
        %v1427 = vsel %vm1423, %v1394, %v851
        %v1428 = vsel %vm1423, %v1395, %v853
        %v1429 = vsel %vm1423, %v1396, %v855
        %v1430 = vsel %vm1423, %v1397, %v857
        %v1431 = vsel %vm1423, %v1398, %v859
        %v1432 = vsel %vm1423, %v1399, %v861
        %v1433 = vsel %vm1423, %v1400, %v863
        %v1434 = vsel %vm1423, %v1401, %v865
        %v1435 = vsel %vm1423, %v1402, %v867
        %v1436 = vsel %vm1423, %v1403, %v869
        %v1437 = vsel %vm1423, %v1404, %v871
        %v1438 = vsel %vm1423, %v1405, %v873
        %v1439 = vsel %vm1423, %v1406, %v875
        %v1440 = vsel %vm1423, %v1407, %v877
        %v1441 = vsel %vm1423, %v1408, %v879
        %v1442 = vsel %vm1423, %v1409, %v881
        %v1443 = vsel %vm1423, %v1410, %v883
        %v1444 = vsel %vm1423, %v1411, %v885
        %v1445 = vsel %vm1423, %v1412, %v887
        %v1446 = vsel %vm1423, %v1413, %v889
        %v1447 = vsel %vm1423, %v1414, %v891
        %v1448 = vsel %vm1423, %v1415, %v893
        %v1449 = vsel %vm1423, %v1416, %v895
        %v1450 = vsel %vm1423, %v1417, %v897
        %v1451 = vsel %vm1423, %v1418, %v899
        %v1452 = vsel %vm1423, %v1419, %v901
        %v1453 = vsel %vm1423, %v1420, %v903
        %v1454 = vsel %vm1423, %v1421, %v905
        %v1455 = vsel %vm1423, %v1422, %v907
        %vm1456 = vcmask 162816
        %v1457 = vsel %vm1456, %v1424, %v941
        %v1458 = vsel %vm1456, %v1425, %v943
        %v1459 = vsel %vm1456, %v1426, %v945
        %v1460 = vsel %vm1456, %v1427, %v947
        %v1461 = vsel %vm1456, %v1428, %v949
        %v1462 = vsel %vm1456, %v1429, %v951
        %v1463 = vsel %vm1456, %v1430, %v953
        %v1464 = vsel %vm1456, %v1431, %v955
        %v1465 = vsel %vm1456, %v1432, %v957
        %v1466 = vsel %vm1456, %v1433, %v959
        %v1467 = vsel %vm1456, %v1434, %v961
        %v1468 = vsel %vm1456, %v1435, %v963
        %v1469 = vsel %vm1456, %v1436, %v965
        %v1470 = vsel %vm1456, %v1437, %v967
        %v1471 = vsel %vm1456, %v1438, %v969
        %v1472 = vsel %vm1456, %v1439, %v971
        %v1473 = vsel %vm1456, %v1440, %v973
        %v1474 = vsel %vm1456, %v1441, %v975
        %v1475 = vsel %vm1456, %v1442, %v977
        %v1476 = vsel %vm1456, %v1443, %v979
        %v1477 = vsel %vm1456, %v1444, %v981
        %v1478 = vsel %vm1456, %v1445, %v983
        %v1479 = vsel %vm1456, %v1446, %v985
        %v1480 = vsel %vm1456, %v1447, %v987
        %v1481 = vsel %vm1456, %v1448, %v989
        %v1482 = vsel %vm1456, %v1449, %v991
        %v1483 = vsel %vm1456, %v1450, %v993
        %v1484 = vsel %vm1456, %v1451, %v995
        %v1485 = vsel %vm1456, %v1452, %v997
        %v1486 = vsel %vm1456, %v1453, %v999
        %v1487 = vsel %vm1456, %v1454, %v1001
        %v1488 = vsel %vm1456, %v1455, %v1003
        %vm1489 = vcmask 195584
        %v1490 = vsel %vm1489, %v1457, %v1037
        %v1491 = vsel %vm1489, %v1458, %v1039
        %v1492 = vsel %vm1489, %v1459, %v1041
        %v1493 = vsel %vm1489, %v1460, %v1043
        %v1494 = vsel %vm1489, %v1461, %v1045
        %v1495 = vsel %vm1489, %v1462, %v1047
        %v1496 = vsel %vm1489, %v1463, %v1049
        %v1497 = vsel %vm1489, %v1464, %v1051
        %v1498 = vsel %vm1489, %v1465, %v1053
        %v1499 = vsel %vm1489, %v1466, %v1055
        %v1500 = vsel %vm1489, %v1467, %v1057
        %v1501 = vsel %vm1489, %v1468, %v1059
        %v1502 = vsel %vm1489, %v1469, %v1061
        %v1503 = vsel %vm1489, %v1470, %v1063
        %v1504 = vsel %vm1489, %v1471, %v1065
        %v1505 = vsel %vm1489, %v1472, %v1067
        %v1506 = vsel %vm1489, %v1473, %v1069
        %v1507 = vsel %vm1489, %v1474, %v1071
        %v1508 = vsel %vm1489, %v1475, %v1073
        %v1509 = vsel %vm1489, %v1476, %v1075
        %v1510 = vsel %vm1489, %v1477, %v1077
        %v1511 = vsel %vm1489, %v1478, %v1079
        %v1512 = vsel %vm1489, %v1479, %v1081
        %v1513 = vsel %vm1489, %v1480, %v1083
        %v1514 = vsel %vm1489, %v1481, %v1085
        %v1515 = vsel %vm1489, %v1482, %v1087
        %v1516 = vsel %vm1489, %v1483, %v1089
        %v1517 = vsel %vm1489, %v1484, %v1091
        %v1518 = vsel %vm1489, %v1485, %v1093
        %v1519 = vsel %vm1489, %v1486, %v1095
        %v1520 = vsel %vm1489, %v1487, %v1097
        %v1521 = vsel %vm1489, %v1488, %v1099
        %vm1522 = vcmask 228352
        %v1523 = vsel %vm1522, %v1490, %v1133
        %v1524 = vsel %vm1522, %v1491, %v1135
        %v1525 = vsel %vm1522, %v1492, %v1137
        %v1526 = vsel %vm1522, %v1493, %v1139
        %v1527 = vsel %vm1522, %v1494, %v1141
        %v1528 = vsel %vm1522, %v1495, %v1143
        %v1529 = vsel %vm1522, %v1496, %v1145
        %v1530 = vsel %vm1522, %v1497, %v1147
        %v1531 = vsel %vm1522, %v1498, %v1149
        %v1532 = vsel %vm1522, %v1499, %v1151
        %v1533 = vsel %vm1522, %v1500, %v1153
        %v1534 = vsel %vm1522, %v1501, %v1155
        %v1535 = vsel %vm1522, %v1502, %v1157
        %v1536 = vsel %vm1522, %v1503, %v1159
        %v1537 = vsel %vm1522, %v1504, %v1161
        %v1538 = vsel %vm1522, %v1505, %v1163
        %v1539 = vsel %vm1522, %v1506, %v1165
        %v1540 = vsel %vm1522, %v1507, %v1167
        %v1541 = vsel %vm1522, %v1508, %v1169
        %v1542 = vsel %vm1522, %v1509, %v1171
        %v1543 = vsel %vm1522, %v1510, %v1173
        %v1544 = vsel %vm1522, %v1511, %v1175
        %v1545 = vsel %vm1522, %v1512, %v1177
        %v1546 = vsel %vm1522, %v1513, %v1179
        %v1547 = vsel %vm1522, %v1514, %v1181
        %v1548 = vsel %vm1522, %v1515, %v1183
        %v1549 = vsel %vm1522, %v1516, %v1185
        %v1550 = vsel %vm1522, %v1517, %v1187
        %v1551 = vsel %vm1522, %v1518, %v1189
        %v1552 = vsel %vm1522, %v1519, %v1191
        %v1553 = vsel %vm1522, %v1520, %v1193
        %v1554 = vsel %vm1522, %v1521, %v1195
        %vm1555 = vcmask 261120
        %v1556 = vsel %vm1555, %v1523, %v1229
        %v1557 = vsel %vm1555, %v1524, %v1231
        %v1558 = vsel %vm1555, %v1525, %v1233
        %v1559 = vsel %vm1555, %v1526, %v1235
        %v1560 = vsel %vm1555, %v1527, %v1237
        %v1561 = vsel %vm1555, %v1528, %v1239
        %v1562 = vsel %vm1555, %v1529, %v1241
        %v1563 = vsel %vm1555, %v1530, %v1243
        %v1564 = vsel %vm1555, %v1531, %v1245
        %v1565 = vsel %vm1555, %v1532, %v1247
        %v1566 = vsel %vm1555, %v1533, %v1249
        %v1567 = vsel %vm1555, %v1534, %v1251
        %v1568 = vsel %vm1555, %v1535, %v1253
        %v1569 = vsel %vm1555, %v1536, %v1255
        %v1570 = vsel %vm1555, %v1537, %v1257
        %v1571 = vsel %vm1555, %v1538, %v1259
        %v1572 = vsel %vm1555, %v1539, %v1261
        %v1573 = vsel %vm1555, %v1540, %v1263
        %v1574 = vsel %vm1555, %v1541, %v1265
        %v1575 = vsel %vm1555, %v1542, %v1267
        %v1576 = vsel %vm1555, %v1543, %v1269
        %v1577 = vsel %vm1555, %v1544, %v1271
        %v1578 = vsel %vm1555, %v1545, %v1273
        %v1579 = vsel %vm1555, %v1546, %v1275
        %v1580 = vsel %vm1555, %v1547, %v1277
        %v1581 = vsel %vm1555, %v1548, %v1279
        %v1582 = vsel %vm1555, %v1549, %v1281
        %v1583 = vsel %vm1555, %v1550, %v1283
        %v1584 = vsel %vm1555, %v1551, %v1285
        %v1585 = vsel %vm1555, %v1552, %v1287
        %v1586 = vsel %vm1555, %v1553, %v1289
        %v1587 = vsel %vm1555, %v1554, %v1291
        %vm1588 = vcmask 293888
        %v1590 = vsel %vm1588, %v1556, 0
        %v1593 = vsel %vm1588, %v1557, 0
        %v1596 = vsel %vm1588, %v1558, 0
        %v1599 = vsel %vm1588, %v1559, 0
        %v1602 = vsel %vm1588, %v1560, 0
        %v1605 = vsel %vm1588, %v1561, 0
        %v1608 = vsel %vm1588, %v1562, 0
        %v1611 = vsel %vm1588, %v1563, 0
        %v1614 = vsel %vm1588, %v1564, 0
        %v1617 = vsel %vm1588, %v1565, 0
        %v1620 = vsel %vm1588, %v1566, 0
        %v1623 = vsel %vm1588, %v1567, 0
        %v1626 = vsel %vm1588, %v1568, 0
        %v1629 = vsel %vm1588, %v1569, 0
        %v1632 = vsel %vm1588, %v1570, 0
        %v1635 = vsel %vm1588, %v1571, 0
        %v1638 = vsel %vm1588, %v1572, 0
        %v1641 = vsel %vm1588, %v1573, 0
        %v1644 = vsel %vm1588, %v1574, 0
        %v1647 = vsel %vm1588, %v1575, 0
        %v1650 = vsel %vm1588, %v1576, 0
        %v1653 = vsel %vm1588, %v1577, 0
        %v1656 = vsel %vm1588, %v1578, 0
        %v1659 = vsel %vm1588, %v1579, 0
        %v1662 = vsel %vm1588, %v1580, 0
        %v1665 = vsel %vm1588, %v1581, 0
        %v1668 = vsel %vm1588, %v1582, 0
        %v1671 = vsel %vm1588, %v1583, 0
        %v1674 = vsel %vm1588, %v1584, 0
        %v1677 = vsel %vm1588, %v1585, 0
        %v1680 = vsel %vm1588, %v1586, 0
        %v1683 = vsel %vm1588, %v1587, 0
        %vm1685 = vcmask 1043456
        %v1687 = vsel %vm1685, %v319, 0
        %1689 = vmatpush.msra.mxu0 0.0
        %1690 = vmatpush.msra.mxu0 0.0
        %1691 = vmatpush.msra.mxu0 0.0
        %1692 = vmatpush.msra.mxu0 0.0
        %1693 = vmatpush.msra.mxu0 0.0
        %1694 = vmatpush.msra.mxu0 0.0
        %1695 = vmatpush.msra.mxu0 0.0
        %1696 = vmatpush.msra.mxu0 0.0
        %1697 = vmatpush.msra.mxu0 0.0
        %1698 = vmatpush.msra.mxu0 0.0
        %1699 = vmatpush.msra.mxu0 0.0
        %1700 = vmatpush.msra.mxu0 %v1687
        %1701 = vmatpush.msra.mxu0 %v318
        %1702 = vmatpush.msra.mxu0 %v317
        %1703 = vmatpush.msra.mxu0 %v316
        %1704 = vmatpush.msra.mxu0 %v315
        %1705 = vmatmul.f32.gmra.mxu0 %v1590
        %v1706 = vpop.f32.mrf.mxu0
        %v1707 = vadd.f32 0.0, %v1706
        %1708 = vmatmul.f32.gmra.mxu0 %v1593
        %v1709 = vpop.f32.mrf.mxu0
        %v1710 = vadd.f32 0.0, %v1709
        %1711 = vmatmul.f32.gmra.mxu0 %v1596
        %v1712 = vpop.f32.mrf.mxu0
        %v1713 = vadd.f32 0.0, %v1712
        %1714 = vmatmul.f32.gmra.mxu0 %v1599
        %v1715 = vpop.f32.mrf.mxu0
        %v1716 = vadd.f32 0.0, %v1715
        %1717 = vmatmul.f32.gmra.mxu0 %v1602
        %v1718 = vpop.f32.mrf.mxu0
        %v1719 = vadd.f32 0.0, %v1718
        %1720 = vmatmul.f32.gmra.mxu0 %v1605
        %v1721 = vpop.f32.mrf.mxu0
        %v1722 = vadd.f32 0.0, %v1721
        %1723 = vmatmul.f32.gmra.mxu0 %v1608
        %v1724 = vpop.f32.mrf.mxu0
        %v1725 = vadd.f32 0.0, %v1724
        %1726 = vmatmul.f32.gmra.mxu0 %v1611
        %v1727 = vpop.f32.mrf.mxu0
        %v1728 = vadd.f32 0.0, %v1727
        %1729 = vmatmul.f32.gmra.mxu0 %v1614
        %v1730 = vpop.f32.mrf.mxu0
        %v1731 = vadd.f32 0.0, %v1730
        %1732 = vmatmul.f32.gmra.mxu0 %v1617
        %v1733 = vpop.f32.mrf.mxu0
        %v1734 = vadd.f32 0.0, %v1733
        %1735 = vmatmul.f32.gmra.mxu0 %v1620
        %v1736 = vpop.f32.mrf.mxu0
        %v1737 = vadd.f32 0.0, %v1736
        %1738 = vmatmul.f32.gmra.mxu0 %v1623
        %v1739 = vpop.f32.mrf.mxu0
        %v1740 = vadd.f32 0.0, %v1739
        %1741 = vmatmul.f32.gmra.mxu0 %v1626
        %v1742 = vpop.f32.mrf.mxu0
        %v1743 = vadd.f32 0.0, %v1742
        %1744 = vmatmul.f32.gmra.mxu0 %v1629
        %v1745 = vpop.f32.mrf.mxu0
        %v1746 = vadd.f32 0.0, %v1745
        %1747 = vmatmul.f32.gmra.mxu0 %v1632
        %v1748 = vpop.f32.mrf.mxu0
        %v1749 = vadd.f32 0.0, %v1748
        %1750 = vmatmul.f32.gmra.mxu0 %v1635
        %v1751 = vpop.f32.mrf.mxu0
        %v1752 = vadd.f32 0.0, %v1751
        %1753 = vmatmul.f32.gmra.mxu0 %v1638
        %v1754 = vpop.f32.mrf.mxu0
        %v1755 = vadd.f32 0.0, %v1754
        %1756 = vmatmul.f32.gmra.mxu0 %v1641
        %v1757 = vpop.f32.mrf.mxu0
        %v1758 = vadd.f32 0.0, %v1757
        %1759 = vmatmul.f32.gmra.mxu0 %v1644
        %v1760 = vpop.f32.mrf.mxu0
        %v1761 = vadd.f32 0.0, %v1760
        %1762 = vmatmul.f32.gmra.mxu0 %v1647
        %v1763 = vpop.f32.mrf.mxu0
        %v1764 = vadd.f32 0.0, %v1763
        %1765 = vmatmul.f32.gmra.mxu0 %v1650
        %v1766 = vpop.f32.mrf.mxu0
        %v1767 = vadd.f32 0.0, %v1766
        %1768 = vmatmul.f32.gmra.mxu0 %v1653
        %v1769 = vpop.f32.mrf.mxu0
        %v1770 = vadd.f32 0.0, %v1769
        %1771 = vmatmul.f32.gmra.mxu0 %v1656
        %v1772 = vpop.f32.mrf.mxu0
        %v1773 = vadd.f32 0.0, %v1772
        %1774 = vmatmul.f32.gmra.mxu0 %v1659
        %v1775 = vpop.f32.mrf.mxu0
        %v1776 = vadd.f32 0.0, %v1775
        %1777 = vmatmul.f32.gmra.mxu0 %v1662
        %v1778 = vpop.f32.mrf.mxu0
        %v1779 = vadd.f32 0.0, %v1778
        %1780 = vmatmul.f32.gmra.mxu0 %v1665
        %v1781 = vpop.f32.mrf.mxu0
        %v1782 = vadd.f32 0.0, %v1781
        %1783 = vmatmul.f32.gmra.mxu0 %v1668
        %v1784 = vpop.f32.mrf.mxu0
        %v1785 = vadd.f32 0.0, %v1784
        %1786 = vmatmul.f32.gmra.mxu0 %v1671
        %v1787 = vpop.f32.mrf.mxu0
        %v1788 = vadd.f32 0.0, %v1787
        %1789 = vmatmul.f32.gmra.mxu0 %v1674
        %v1790 = vpop.f32.mrf.mxu0
        %v1791 = vadd.f32 0.0, %v1790
        %1792 = vmatmul.f32.gmra.mxu0 %v1677
        %v1793 = vpop.f32.mrf.mxu0
        %v1794 = vadd.f32 0.0, %v1793
        %1795 = vmatmul.f32.gmra.mxu0 %v1680
        %v1796 = vpop.f32.mrf.mxu0
        %v1797 = vadd.f32 0.0, %v1796
        %1798 = vmatmul.f32.gmra.mxu0 %v1683
        %v1799 = vpop.f32.mrf.mxu0
        %v1800 = vadd.f32 0.0, %v1799
        %1801 = vdwg.mxu0
        %1802 = vst.msk [vmem:[%s260] sm:$0xff] %vm1357, %v1707
        %1803 = vst.msk [vmem:[%s260 + $0x8] sm:$0xff] %vm1357, %v1710
        %1804 = vst.msk [vmem:[%s260 + $0x10] sm:$0xff] %vm1357, %v1713
        %1805 = vst.msk [vmem:[%s260 + $0x18] sm:$0xff] %vm1357, %v1716
        %1806 = vst.msk [vmem:[%s260 + $0x20] sm:$0xff] %vm1357, %v1719
        %1807 = vst.msk [vmem:[%s260 + $0x28] sm:$0xff] %vm1357, %v1722
        %1808 = vst.msk [vmem:[%s260 + $0x30] sm:$0xff] %vm1357, %v1725
        %1809 = vst.msk [vmem:[%s260 + $0x38] sm:$0xff] %vm1357, %v1728
        %1810 = vst.msk [vmem:[%s260 + $0x40] sm:$0xff] %vm1357, %v1731
        %1811 = vst.msk [vmem:[%s260 + $0x48] sm:$0xff] %vm1357, %v1734
        %1812 = vst.msk [vmem:[%s260 + $0x50] sm:$0xff] %vm1357, %v1737
        %1813 = vst.msk [vmem:[%s260 + $0x58] sm:$0xff] %vm1357, %v1740
        %1814 = vst.msk [vmem:[%s260 + $0x60] sm:$0xff] %vm1357, %v1743
        %1815 = vst.msk [vmem:[%s260 + $0x68] sm:$0xff] %vm1357, %v1746
        %1816 = vst.msk [vmem:[%s260 + $0x70] sm:$0xff] %vm1357, %v1749
        %1817 = vst.msk [vmem:[%s260 + $0x78] sm:$0xff] %vm1357, %v1752
        %1818 = vst.msk [vmem:[%s260 + $0x80] sm:$0xff] %vm1357, %v1755
        %1819 = vst.msk [vmem:[%s260 + $0x88] sm:$0xff] %vm1357, %v1758
        %1820 = vst.msk [vmem:[%s260 + $0x90] sm:$0xff] %vm1357, %v1761
        %1821 = vst.msk [vmem:[%s260 + $0x98] sm:$0xff] %vm1357, %v1764
        %1822 = vst.msk [vmem:[%s260 + $0xa0] sm:$0xff] %vm1357, %v1767
        %1823 = vst.msk [vmem:[%s260 + $0xa8] sm:$0xff] %vm1357, %v1770
        %1824 = vst.msk [vmem:[%s260 + $0xb0] sm:$0xff] %vm1357, %v1773
        %1825 = vst.msk [vmem:[%s260 + $0xb8] sm:$0xff] %vm1357, %v1776
        %1826 = vst.msk [vmem:[%s260 + $0xc0] sm:$0xff] %vm1357, %v1779
        %1827 = vst.msk [vmem:[%s260 + $0xc8] sm:$0xff] %vm1357, %v1782
        %1828 = vst.msk [vmem:[%s260 + $0xd0] sm:$0xff] %vm1357, %v1785
        %1829 = vst.msk [vmem:[%s260 + $0xd8] sm:$0xff] %vm1357, %v1788
        %1830 = vst.msk [vmem:[%s260 + $0xe0] sm:$0xff] %vm1357, %v1791
        %1831 = vst.msk [vmem:[%s260 + $0xe8] sm:$0xff] %vm1357, %v1794
        %1832 = vst.msk [vmem:[%s260 + $0xf0] sm:$0xff] %vm1357, %v1797
        %1833 = vst.msk [vmem:[%s260 + $0xf8] sm:$0xff] %vm1357, %v1800
        %p1834 = scmp.eq.s32.totalorder %s23, 0
        // Predicated region
        $region29: #{tpu_custom_call.1} parent=27 // pred_check
          %p1835 = pneg %p1834
        $region30: #{tpu_custom_call.1} parent=27 // pred_check_branch
          %1837 = sbr.rel (%p1835) target = $region32
        $region31: #{tpu_custom_call.1} parent=27 // pred_region
          %vm1838 = vcmask 57344
          %1839 = vst.msk [vmem:[#allocation2] sm:$0x1] %vm1838, 0.0
          %1840 = vst.msk [vmem:[#allocation4] sm:$0x1] %vm1838, 0.0
        $region32: #{tpu_custom_call.1} parent=27 // pred_fallthru
          _
        %v1841 = vld [vmem:[#allocation2] sm:$0x1]
        %v1842 = vsel %vm1357, %v1707, 0.0
        %v1843 = vsel %vm1357, %v1710, 0.0
        %v1844 = vadd.f32 %v1842, %v1843
        %v1845 = vsel %vm1357, %v1713, 0.0
        %v1846 = vadd.f32 %v1844, %v1845
        %v1847 = vsel %vm1357, %v1716, 0.0
        %v1848 = vadd.f32 %v1846, %v1847
        %v1849 = vsel %vm1357, %v1719, 0.0
        %v1850 = vadd.f32 %v1848, %v1849
        %v1851 = vsel %vm1357, %v1722, 0.0
        %v1852 = vadd.f32 %v1850, %v1851
        %v1853 = vsel %vm1357, %v1725, 0.0
        %v1854 = vadd.f32 %v1852, %v1853
        %v1855 = vsel %vm1357, %v1728, 0.0
        %v1856 = vadd.f32 %v1854, %v1855
        %v1857 = vsel %vm1357, %v1731, 0.0
        %v1858 = vadd.f32 %v1856, %v1857
        %v1859 = vsel %vm1357, %v1734, 0.0
        %v1860 = vadd.f32 %v1858, %v1859
        %v1861 = vsel %vm1357, %v1737, 0.0
        %v1862 = vadd.f32 %v1860, %v1861
        %v1863 = vsel %vm1357, %v1740, 0.0
        %v1864 = vadd.f32 %v1862, %v1863
        %v1865 = vsel %vm1357, %v1743, 0.0
        %v1866 = vadd.f32 %v1864, %v1865
        %v1867 = vsel %vm1357, %v1746, 0.0
        %v1868 = vadd.f32 %v1866, %v1867
        %v1869 = vsel %vm1357, %v1749, 0.0
        %v1870 = vadd.f32 %v1868, %v1869
        %v1871 = vsel %vm1357, %v1752, 0.0
        %v1872 = vadd.f32 %v1870, %v1871
        %v1873 = vsel %vm1357, %v1755, 0.0
        %v1874 = vadd.f32 %v1872, %v1873
        %v1875 = vsel %vm1357, %v1758, 0.0
        %v1876 = vadd.f32 %v1874, %v1875
        %v1877 = vsel %vm1357, %v1761, 0.0
        %v1878 = vadd.f32 %v1876, %v1877
        %v1879 = vsel %vm1357, %v1764, 0.0
        %v1880 = vadd.f32 %v1878, %v1879
        %v1881 = vsel %vm1357, %v1767, 0.0
        %v1882 = vadd.f32 %v1880, %v1881
        %v1883 = vsel %vm1357, %v1770, 0.0
        %v1884 = vadd.f32 %v1882, %v1883
        %v1885 = vsel %vm1357, %v1773, 0.0
        %v1886 = vadd.f32 %v1884, %v1885
        %v1887 = vsel %vm1357, %v1776, 0.0
        %v1888 = vadd.f32 %v1886, %v1887
        %v1889 = vsel %vm1357, %v1779, 0.0
        %v1890 = vadd.f32 %v1888, %v1889
        %v1891 = vsel %vm1357, %v1782, 0.0
        %v1892 = vadd.f32 %v1890, %v1891
        %v1893 = vsel %vm1357, %v1785, 0.0
        %v1894 = vadd.f32 %v1892, %v1893
        %v1895 = vsel %vm1357, %v1788, 0.0
        %v1896 = vadd.f32 %v1894, %v1895
        %v1897 = vsel %vm1357, %v1791, 0.0
        %v1898 = vadd.f32 %v1896, %v1897
        %v1899 = vsel %vm1357, %v1794, 0.0
        %v1900 = vadd.f32 %v1898, %v1899
        %v1901 = vsel %vm1357, %v1797, 0.0
        %v1902 = vadd.f32 %v1900, %v1901
        %v1903 = vsel %vm1357, %v1800, 0.0
        %v1904 = vadd.f32 %v1902, %v1903
        %v1905 = vrot.slane %v1904, 4
        %v1906 = vadd.f32 %v1904, %v1905
        %v1907 = vrot.slane %v1906, 2
        %v1908 = vadd.f32 %v1906, %v1907
        %v1909 = vrot.slane %v1908, 1
        %v1910 = vadd.f32 %v1908, %v1909
        %v1911 = vadd.f32 %v1841, %v1910
        %vm1912 = vcmask 57344
        %1913 = vst.msk [vmem:[#allocation2] sm:$0x1] %vm1912, %v1911
        %v1914 = vld [vmem:[#allocation4] sm:$0x1]
        %v1915 = vmul.f32 %v1707, %v1707
        %v1916 = vmul.f32 %v1710, %v1710
        %v1917 = vmul.f32 %v1713, %v1713
        %v1918 = vmul.f32 %v1716, %v1716
        %v1919 = vmul.f32 %v1719, %v1719
        %v1920 = vmul.f32 %v1722, %v1722
        %v1921 = vmul.f32 %v1725, %v1725
        %v1922 = vmul.f32 %v1728, %v1728
        %v1923 = vmul.f32 %v1731, %v1731
        %v1924 = vmul.f32 %v1734, %v1734
        %v1925 = vmul.f32 %v1737, %v1737
        %v1926 = vmul.f32 %v1740, %v1740
        %v1927 = vmul.f32 %v1743, %v1743
        %v1928 = vmul.f32 %v1746, %v1746
        %v1929 = vmul.f32 %v1749, %v1749
        %v1930 = vmul.f32 %v1752, %v1752
        %v1931 = vmul.f32 %v1755, %v1755
        %v1932 = vmul.f32 %v1758, %v1758
        %v1933 = vmul.f32 %v1761, %v1761
        %v1934 = vmul.f32 %v1764, %v1764
        %v1935 = vmul.f32 %v1767, %v1767
        %v1936 = vmul.f32 %v1770, %v1770
        %v1937 = vmul.f32 %v1773, %v1773
        %v1938 = vmul.f32 %v1776, %v1776
        %v1939 = vmul.f32 %v1779, %v1779
        %v1940 = vmul.f32 %v1782, %v1782
        %v1941 = vmul.f32 %v1785, %v1785
        %v1942 = vmul.f32 %v1788, %v1788
        %v1943 = vmul.f32 %v1791, %v1791
        %v1944 = vmul.f32 %v1794, %v1794
        %v1945 = vmul.f32 %v1797, %v1797
        %v1946 = vmul.f32 %v1800, %v1800
        %v1947 = vsel %vm1357, %v1915, 0.0
        %v1948 = vsel %vm1357, %v1916, 0.0
        %v1949 = vadd.f32 %v1947, %v1948
        %v1950 = vsel %vm1357, %v1917, 0.0
        %v1951 = vadd.f32 %v1949, %v1950
        %v1952 = vsel %vm1357, %v1918, 0.0
        %v1953 = vadd.f32 %v1951, %v1952
        %v1954 = vsel %vm1357, %v1919, 0.0
        %v1955 = vadd.f32 %v1953, %v1954
        %v1956 = vsel %vm1357, %v1920, 0.0
        %v1957 = vadd.f32 %v1955, %v1956
        %v1958 = vsel %vm1357, %v1921, 0.0
        %v1959 = vadd.f32 %v1957, %v1958
        %v1960 = vsel %vm1357, %v1922, 0.0
        %v1961 = vadd.f32 %v1959, %v1960
        %v1962 = vsel %vm1357, %v1923, 0.0
        %v1963 = vadd.f32 %v1961, %v1962
        %v1964 = vsel %vm1357, %v1924, 0.0
        %v1965 = vadd.f32 %v1963, %v1964
        %v1966 = vsel %vm1357, %v1925, 0.0
        %v1967 = vadd.f32 %v1965, %v1966
        %v1968 = vsel %vm1357, %v1926, 0.0
        %v1969 = vadd.f32 %v1967, %v1968
        %v1970 = vsel %vm1357, %v1927, 0.0
        %v1971 = vadd.f32 %v1969, %v1970
        %v1972 = vsel %vm1357, %v1928, 0.0
        %v1973 = vadd.f32 %v1971, %v1972
        %v1974 = vsel %vm1357, %v1929, 0.0
        %v1975 = vadd.f32 %v1973, %v1974
        %v1976 = vsel %vm1357, %v1930, 0.0
        %v1977 = vadd.f32 %v1975, %v1976
        %v1978 = vsel %vm1357, %v1931, 0.0
        %v1979 = vadd.f32 %v1977, %v1978
        %v1980 = vsel %vm1357, %v1932, 0.0
        %v1981 = vadd.f32 %v1979, %v1980
        %v1982 = vsel %vm1357, %v1933, 0.0
        %v1983 = vadd.f32 %v1981, %v1982
        %v1984 = vsel %vm1357, %v1934, 0.0
        %v1985 = vadd.f32 %v1983, %v1984
        %v1986 = vsel %vm1357, %v1935, 0.0
        %v1987 = vadd.f32 %v1985, %v1986
        %v1988 = vsel %vm1357, %v1936, 0.0
        %v1989 = vadd.f32 %v1987, %v1988
        %v1990 = vsel %vm1357, %v1937, 0.0
        %v1991 = vadd.f32 %v1989, %v1990
        %v1992 = vsel %vm1357, %v1938, 0.0
        %v1993 = vadd.f32 %v1991, %v1992
        %v1994 = vsel %vm1357, %v1939, 0.0
        %v1995 = vadd.f32 %v1993, %v1994
        %v1996 = vsel %vm1357, %v1940, 0.0
        %v1997 = vadd.f32 %v1995, %v1996
        %v1998 = vsel %vm1357, %v1941, 0.0
        %v1999 = vadd.f32 %v1997, %v1998
        %v2000 = vsel %vm1357, %v1942, 0.0
        %v2001 = vadd.f32 %v1999, %v2000
        %v2002 = vsel %vm1357, %v1943, 0.0
        %v2003 = vadd.f32 %v2001, %v2002
        %v2004 = vsel %vm1357, %v1944, 0.0
        %v2005 = vadd.f32 %v2003, %v2004
        %v2006 = vsel %vm1357, %v1945, 0.0
        %v2007 = vadd.f32 %v2005, %v2006
        %v2008 = vsel %vm1357, %v1946, 0.0
        %v2009 = vadd.f32 %v2007, %v2008
        %v2010 = vrot.slane %v2009, 4
        %v2011 = vadd.f32 %v2009, %v2010
        %v2012 = vrot.slane %v2011, 2
        %v2013 = vadd.f32 %v2011, %v2012
        %v2014 = vrot.slane %v2013, 1
        %v2015 = vadd.f32 %v2013, %v2014
        %v2016 = vadd.f32 %v1914, %v2015
        %2017 = vst.msk [vmem:[#allocation4] sm:$0x1] %vm1912, %v2016
        %p2018 = scmp.lt.s32.totalorder %s22, 0
        %s2019 = scalar_select %p2018, %s22, 0
        %p2020 = scmp.lt.s32.totalorder %s23, 1
        %s2021 = scalar_select %p2020, %s23, 1
        %s2022 = smul.addr %s2021, 32
        %s2023 = smul.addr %s2019, 64
        %s2024 = sadd.s32 %s2022, %s2023
        %s2025 = smul.addr %s2024, 8
        %s2026 = scalar_lea.vmem %s2, %s2025
        // Predicated region
        $region33: #{tpu_custom_call.1} parent=27 // pred_check
          %p2027 = pneg %p104
        $region34: #{tpu_custom_call.1} parent=27 // pred_check_branch
          %2029 = sbr.rel (%p2027) target = $region36
        $region35: #{tpu_custom_call.1} parent=27 // pred_region
          _
        $region36: #{tpu_custom_call.1} parent=27 // pred_fallthru
          _
        // Predicated region
        $region37: #{tpu_custom_call.1} parent=27 // pred_check
          %p2030 = pneg %p130
        $region38: #{tpu_custom_call.1} parent=27 // pred_check_branch
          %2032 = sbr.rel (%p2030) target = $region40
        $region39: #{tpu_custom_call.1} parent=27 // pred_region
          %2034 = vsyncadd [#allocation3], 0
          %s2035 = scalar_lea.hbm %s3, %s22
          %s2037 = sshll.u32 [#allocation2], 4
          %s2038 = int_to_ptr.vmem [resolvable:$true] %s2037
          %s2039 = sshll.u32 %s2035, 4
          %s2040 = int_to_ptr.hbm [resolvable:$true] %s2039
          %2042 = dma.vmem_to_hbm [thread:$0]  %s2038, 16, %s2040, [#allocation3]
        $region40: #{tpu_custom_call.1} parent=27 // pred_fallthru
          _
        // Predicated region
        $region41: #{tpu_custom_call.1} parent=27 // pred_check
          %p2043 = pneg %p156
        $region42: #{tpu_custom_call.1} parent=27 // pred_check_branch
          %2045 = sbr.rel (%p2043) target = $region44
        $region43: #{tpu_custom_call.1} parent=27 // pred_region
          %2047 = vsyncadd [#allocation5], 0
          %s2048 = scalar_lea.hbm %s4, %s22
          %s2050 = sshll.u32 [#allocation4], 4
          %s2051 = int_to_ptr.vmem [resolvable:$true] %s2050
          %s2052 = sshll.u32 %s2048, 4
          %s2053 = int_to_ptr.hbm [resolvable:$true] %s2052
          %2055 = dma.vmem_to_hbm [thread:$0]  %s2051, 16, %s2053, [#allocation5]
        $region44: #{tpu_custom_call.1} parent=27 // pred_fallthru
          _
        // Predicated region
        $region45: #{tpu_custom_call.1} parent=27 // pred_check
          %p2056 = pneg %p130
        $region46: #{tpu_custom_call.1} parent=27 // pred_check_branch
          %2058 = sbr.rel (%p2056) target = $region48
        $region47: #{tpu_custom_call.1} parent=27 // pred_region
          %2060 = dma.done [#allocation3], 16
        $region48: #{tpu_custom_call.1} parent=27 // pred_fallthru
          _
        // Predicated region
        $region49: #{tpu_custom_call.1} parent=27 // pred_check
          %p2061 = pneg %p156
        $region50: #{tpu_custom_call.1} parent=27 // pred_check_branch
          %2063 = sbr.rel (%p2061) target = $region52
        $region51: #{tpu_custom_call.1} parent=27 // pred_region
          %2065 = dma.done [#allocation5], 16
        $region52: #{tpu_custom_call.1} parent=27 // pred_fallthru
          _
      $region28: #{tpu_custom_call.1} parent=5 // pred_fallthru
        _
      %p2066 = scmp.le.s32.totalorder 2, %s13
      // Predicated region
      $region53: #{tpu_custom_call.1} parent=5 // pred_check
        %p2067 = pneg %p2066
      $region54: #{tpu_custom_call.1} parent=5 // pred_check_branch
        %2069 = sbr.rel (%p2067) target = $region56
      $region55: #{tpu_custom_call.1} parent=5 // pred_region
        %s2070 = ssub.s32 %s13, 2
        // Predicated region
        $region57: #{tpu_custom_call.1} parent=55 // pred_check
          %p2071 = pneg %p110
        $region58: #{tpu_custom_call.1} parent=55 // pred_check_branch
          %2073 = sbr.rel (%p2071) target = $region60
        $region59: #{tpu_custom_call.1} parent=55 // pred_region
          %p2074 = scmp.lt.s32.totalorder %s24, 0
          %s2075 = scalar_select %p2074, %s24, 0
          %p2076 = scmp.lt.s32.totalorder %s25, 1
          %s2077 = scalar_select %p2076, %s25, 1
          %s2078 = smul.addr %s2077, 32
          %s2079 = smul.addr %s2075, 64
          %s2080 = sadd.s32 %s2078, %s2079
          %s2081 = smul.addr %s2080, 8
          %s2082 = scalar_lea.vmem %s2, %s2081
        $region60: #{tpu_custom_call.1} parent=55 // pred_fallthru
          _
      $region56: #{tpu_custom_call.1} parent=5 // pred_fallthru
        _
    $region6: #{tpu_custom_call.1} parent=1 // loop_footer
      %s17 = sadd.s32 1, %s13
    $region7: #{tpu_custom_call.1} parent=1 // loop_footer_branch
      %12 = sbr.rel target = $region3
    $region8: #{tpu_custom_call.1} parent=1 // loop_exit
      _
    %2083 = vsyncpa [#allocation3], 1
    %s2084 = scalar_lea.sflag [#allocation3], 1
    %2085 = vsyncpa %s2084, 1
    %2086 = vsyncpa [#allocation5], 1

</llo_original>
